<compile_context>
chip_gen: v7x
topology: tpu7x:2x2x1
jax: 0.10.0
libtpu: 0.0.40
codegen_flags: <defaults>
</compile_context>

<pallas_src>
import functools

import jax
import jax.numpy as jnp
from jax.experimental import pallas as pl
from jax.experimental.pallas import tpu as pltpu

H = 128            # conv out channels == LSTM input == LSTM hidden
C_IN = 100         # Conv1d in_channels
C_PAD = 128        # channels padded to the lane width
K = 3              # Conv1d kernel_size
HALO = 16          # extra frames streamed per chunk for the k=3 conv taps
FC1 = 50
FC1_PAD = 128      # padded fc1 width (lane-dense kernel output)
G4 = 4 * H
BN_EPS = 1e-5


def _bilstm_kernel(xb_ref, xh_ref, wconv_ref, bnscale_ref, bnshift_ref,
                   wih_ref, whh_ref, blstm_ref, wfc1_ref, bfc1_ref,
                   zsum_ref, xcat_ref, gin_ref, hall_ref, *, last_valid, gate_dtype):
    """One T-chunk: conv+BN+ReLU, LSTM recurrence over N speakers, fc1+ELU, frame sum."""
    n_spk, t_chunk, _ = xb_ref.shape
    f32 = jnp.float32
    rows = n_spk * t_chunk

    # ---- Conv1d(100->128, k=3): stitch chunk + halo contiguously, then 3 tap matmuls ----
    xcat_ref[:, 0:t_chunk, :] = xb_ref[...]                       # aligned stores
    xcat_ref[:, t_chunk:t_chunk + HALO, :] = xh_ref[...]
    y = None
    for k in range(K):                                            # static unroll, k in {0,1,2}
        xk = xcat_ref[:, k:k + t_chunk, :].reshape(rows, C_PAD)   # bf16 tap window
        yk = jnp.dot(xk, wconv_ref[k], preferred_element_type=f32)
        y = yk if y is None else y + yk
    y = jnp.maximum(y * bnscale_ref[...] + bnshift_ref[...], 0.0)  # folded BN(eval)+bias, ReLU

    # ---- input-to-gate projection (LSTM biases folded in), batched over the chunk ----
    gin = jnp.dot(y.astype(jnp.bfloat16), wih_ref[...], preferred_element_type=f32)
    gin_ref[...] = (gin + blstm_ref[...]).reshape(n_spk, t_chunk, G4)

    # ---- LSTM recurrence: sequence axis = N speakers, batch axis = frames ----
    w_hh = whh_ref[...]                                           # (H, 4H) bf16, hoisted

    def sig(v):                                                   # sigmoid as a single EUP tanh
        return 0.5 * jnp.tanh(0.5 * v) + 0.5

    def step(n, carry):
        h, c = carry                                              # h: bf16, c: f32
        gates = gin_ref[n] + jnp.dot(h, w_hh, preferred_element_type=f32)   # (t_chunk, 4H)
        g = gates.astype(gate_dtype)
        i_g = sig(g[:, 0:H])                                      # PyTorch gate order i,f,g,o
        f_g = sig(g[:, H:2 * H])
        g_g = jnp.tanh(g[:, 2 * H:3 * H])
        o_g = sig(g[:, 3 * H:4 * H])
        c = f_g.astype(f32) * c + i_g.astype(f32) * g_g.astype(f32)   # f32 state accumulation
        h = (o_g * jnp.tanh(c.astype(gate_dtype))).astype(jnp.bfloat16)
        hall_ref[n] = h
        return (h, c)

    h0 = jnp.zeros((t_chunk, H), jnp.bfloat16)
    c0 = jnp.zeros((t_chunk, H), f32)
    jax.lax.fori_loop(0, n_spk, step, (h0, c0), unroll=2)         # bounded unroll

    # ---- TimeDistributed fc1 + ELU, batched over the chunk ----
    hall = hall_ref[...].reshape(rows, H)                         # bf16
    z = jnp.dot(hall, wfc1_ref[...], preferred_element_type=f32) + bfc1_ref[...]
    z = jnp.where(z > 0, z, jnp.exp(jnp.minimum(z, 0.0)) - 1.0)   # ELU(alpha=1)
    # TODO(synk): nn.Dropout(p=0.2) has no deterministic equivalent; inference identity.
    z = z.reshape(n_spk, t_chunk, FC1_PAD)

    def emit(vals):
        zsum_ref[...] = jnp.sum(vals, axis=1).reshape(1, n_spk, FC1_PAD)

    if last_valid == t_chunk:          # static: every chunk is full, no masking anywhere
        emit(z)
    else:                              # only the last chunk contains padded frames
        is_last = pl.program_id(0) == pl.num_programs(0) - 1

        @pl.when(is_last)
        def _():
            t_in = jax.lax.broadcasted_iota(jnp.int32, (n_spk, t_chunk, FC1_PAD), 1)
            emit(jnp.where(t_in < last_valid, z, 0.0))

        @pl.when(jnp.logical_not(is_last))
        def _():
            emit(z)


def init_params(key):
    """Deterministic parameter init mirroring the module's __init__ shapes."""
    ks = jax.random.split(key, 7)
    p = {}
    # Conv1d(100 -> 128, k=3)
    p["w_conv"] = jax.random.normal(ks[0], (H, C_IN, K), jnp.float32) / jnp.sqrt(C_IN * K)
    p["b_conv"] = jnp.zeros((H,), jnp.float32)
    # BatchNorm1d(128) (fresh module => gamma=1, beta=0, running stats 0/1)
    p["bn_gamma"] = jnp.ones((H,), jnp.float32)
    p["bn_beta"] = jnp.zeros((H,), jnp.float32)
    p["bn_mean"] = jnp.zeros((H,), jnp.float32)
    p["bn_var"] = jnp.ones((H,), jnp.float32)
    # LSTM(128 -> 128): xavier_normal_ weights; biases zero with [100:200] = -3
    xav = jnp.sqrt(2.0 / (4 * H + H))
    p["w_ih"] = jax.random.normal(ks[1], (4 * H, H), jnp.float32) * xav
    p["w_hh"] = jax.random.normal(ks[2], (4 * H, H), jnp.float32) * xav
    p["b_ih"] = jnp.zeros((4 * H,), jnp.float32).at[100:200].set(-3.0)
    p["b_hh"] = jnp.zeros((4 * H,), jnp.float32).at[100:200].set(-3.0)
    # fc1: Linear(128 -> 50), fc2: Linear(50 -> 1)
    p["w_fc1"] = jax.random.normal(ks[3], (FC1, H), jnp.float32) / jnp.sqrt(H)
    p["b_fc1"] = jax.random.normal(ks[4], (FC1,), jnp.float32) / jnp.sqrt(H)
    p["w_fc2"] = jax.random.normal(ks[5], (1, FC1), jnp.float32) / jnp.sqrt(FC1)
    p["b_fc2"] = jax.random.normal(ks[6], (1,), jnp.float32) / jnp.sqrt(FC1)
    return p


def _round_up(v, m):
    return ((v + m - 1) // m) * m


def _device_kind():
    try:
        return jax.devices()[0].device_kind.lower()
    except Exception:
        return ""


def _plan(t_frames, n_spk, requested_chunk):
    """Per-generation chunk size / VMEM budget / gate-dtype planning."""
    kind = _device_kind()
    two_cores = ("v7" in kind) or ("7x" in kind)
    if two_cores:
        vmem_limit = 48 * 1024 * 1024            # v7x: 64 MiB physical VMEM per TC
    elif ("v5" in kind) or ("v6" in kind):
        vmem_limit = 96 * 1024 * 1024            # v5e/v6e: 128 MiB physical VMEM
    else:
        vmem_limit = 64 * 1024 * 1024
    # bf16 EUP/VPU exists on v6e/v7x; keep f32 gates on v5e and unknown chips.
    gate_dtype = jnp.bfloat16 if any(t in kind for t in ("v6", "v7", "7x")) else jnp.float32

    chunk = requested_chunk if requested_chunk is not None else (128 if "v5" in kind else 256)
    chunk = max(16, _round_up(int(chunk), 16))
    chunk = min(chunk, _round_up(t_frames, 16))
    if t_frames > 16:                            # keep >= 2 chunks (megacore / pipelining)
        chunk = min(chunk, _round_up(pl.cdiv(t_frames, 2), 16))
    # rough per-frame VMEM footprint: double-buffered x body + xcat/gin/hall scratch
    # + the f32 intermediates (y, gin, z) built inside the kernel.
    per_row = (2 * C_PAD * 2) + (C_PAD * 2) + (G4 * 4) + (H * 2) + ((C_PAD + G4 + H + FC1_PAD) * 4)
    while chunk > 16 and n_spk * chunk * per_row > int(0.6 * vmem_limit):
        chunk -= 16
    num_chunks = pl.cdiv(t_frames, chunk)
    if two_cores and num_chunks > 1 and num_chunks % 2 == 1:
        chunk = max(16, _round_up(pl.cdiv(t_frames, num_chunks + 1), 16))
        num_chunks = pl.cdiv(t_frames, chunk)
    return chunk, num_chunks, vmem_limit, gate_dtype


def bilstm_forward(x, params, *, chunk_t=None):
    """x: (N, 100, L) float32 (or (N, 1, 100, L)). Returns (N, 1) sigmoid scores."""
    # Mirror x.squeeze(): drop singleton dims, but never the leading speaker axis.
    if x.ndim > 3:
        squeeze_axes = tuple(i for i in range(1, x.ndim) if x.shape[i] == 1)
        x = jnp.squeeze(x, axis=squeeze_axes)
    assert x.ndim == 3 and x.shape[1] == C_IN, f"expected (N, {C_IN}, L), got {x.shape}"
    n_spk, _, length = x.shape
    t_frames = length - K + 1

    chunk, num_chunks, vmem_limit, gate_dtype = _plan(t_frames, n_spk, chunk_t)
    t_pad = num_chunks * chunk
    last_valid = t_frames - (num_chunks - 1) * chunk        # valid frames in the last chunk

    # --- glue: layout only (no host-side im2col; channels padded 100 -> 128) ---
    x_nlc = jnp.transpose(x, (0, 2, 1))                                        # (N, L, C_IN)
    x_pad = jnp.pad(x_nlc.astype(jnp.bfloat16),
                    ((0, 0), (0, t_pad + HALO - length), (0, C_PAD - C_IN)))   # (N, Tp+16, 128)

    w_conv = jnp.transpose(params["w_conv"], (2, 1, 0))                        # (K, C_IN, H)
    w_conv = jnp.pad(w_conv, ((0, 0), (0, C_PAD - C_IN), (0, 0))).astype(jnp.bfloat16)
    bn_scale = params["bn_gamma"] / jnp.sqrt(params["bn_var"] + BN_EPS)
    bn_shift = (params["bn_beta"] - params["bn_mean"] * bn_scale
                + params["b_conv"] * bn_scale)                                 # conv bias folded
    bn_scale = bn_scale.reshape(1, H).astype(jnp.float32)
    bn_shift = bn_shift.reshape(1, H).astype(jnp.float32)
    w_ih_t = params["w_ih"].T.astype(jnp.bfloat16)                             # (H, 4H)
    w_hh_t = params["w_hh"].T.astype(jnp.bfloat16)                             # (H, 4H)
    b_lstm = (params["b_ih"] + params["b_hh"]).reshape(1, G4).astype(jnp.float32)
    w_fc1_t = jnp.pad(params["w_fc1"].T, ((0, 0), (0, FC1_PAD - FC1))).astype(jnp.bfloat16)
    b_fc1 = jnp.pad(params["b_fc1"], (0, FC1_PAD - FC1)).reshape(1, FC1_PAD).astype(jnp.float32)

    halo_step = chunk // HALO                                                  # halo block stride

    def full(a):
        return pl.BlockSpec(a.shape, lambda i: (0,) * a.ndim)

    grid_spec = pltpu.PrefetchScalarGridSpec(
        num_scalar_prefetch=0,
        grid=(num_chunks,),
        in_specs=[
            pl.BlockSpec((n_spk, chunk, C_PAD), lambda i: (0, i, 0)),                 # body frames
            pl.BlockSpec((n_spk, HALO, C_PAD), lambda i: (0, (i + 1) * halo_step, 0)),  # halo
            full(w_conv), full(bn_scale), full(bn_shift),
            full(w_ih_t), full(w_hh_t), full(b_lstm),
            full(w_fc1_t), full(b_fc1),
        ],
        out_specs=pl.BlockSpec((1, n_spk, FC1_PAD), lambda i: (i, 0, 0)),
        scratch_shapes=[
            pltpu.VMEM((n_spk, chunk + HALO, C_PAD), jnp.bfloat16),   # stitched conv window
            pltpu.VMEM((n_spk, chunk, G4), jnp.float32),              # gate input proj (+bias)
            pltpu.VMEM((n_spk, chunk, H), jnp.bfloat16),              # per-speaker hidden states
        ],
    )

    rows_total = n_spk * t_pad
    flops = 2 * rows_total * (K * C_PAD * H + 2 * H * G4 + H * FC1_PAD)
    transcendentals = rows_total * (5 * H + FC1_PAD)
    bytes_accessed = int(
        x_pad.size * 2
        + num_chunks * n_spk * HALO * C_PAD * 2
        + (w_conv.size + w_ih_t.size + w_hh_t.size + w_fc1_t.size) * 2
        + (bn_scale.size + bn_shift.size + b_lstm.size + b_fc1.size) * 4
        + num_chunks * n_spk * FC1_PAD * 4)

    z_sums = pl.pallas_call(
        functools.partial(_bilstm_kernel, last_valid=last_valid, gate_dtype=gate_dtype),
        out_shape=jax.ShapeDtypeStruct((num_chunks, n_spk, FC1_PAD), jnp.float32),
        grid_spec=grid_spec,
        compiler_params=pltpu.CompilerParams(
            dimension_semantics=("parallel",),
            vmem_limit_bytes=vmem_limit,
        ),
        cost_estimate=pl.CostEstimate(
            flops=int(flops),
            transcendentals=int(transcendentals),
            bytes_accessed=bytes_accessed,
        ),
    )(x_pad, x_pad, w_conv, bn_scale, bn_shift, w_ih_t, w_hh_t, b_lstm, w_fc1_t, b_fc1)

    # --- tiny exact epilogue: fc2 and the temporal mean are linear; sigmoid last ---
    z_bar = jnp.sum(z_sums, axis=0)[:, :FC1] / t_frames                        # (N, 50)
    score = z_bar @ params["w_fc2"].T + params["b_fc2"]                        # (N, 1)
    return jax.nn.sigmoid(score)


if __name__ == "__main__":
    key = jax.random.PRNGKey(0)
    kx, kp = jax.random.split(key)
    # N=2 speakers, 100 channels (fixed by Conv1d in_channels), L=36 frames -> T=34:
    # exercises the multi-chunk grid plus the partial-last-chunk masking path.
    x = jax.random.normal(kx, (2, C_IN, 36), jnp.float32)
    params = init_params(kp)
    out = jax.block_until_ready(bilstm_forward(x, params))
    assert out.shape == (2, 1) and bool(jnp.all(jnp.isfinite(out)))
    print("KERNEL_OK")
</pallas_src>

<mosaic_0001>
module attributes {stable_mosaic.version = 11 : i64} {
  func.func @_bilstm_kernel(%arg0: i32, %arg1: memref<2x32x128xbf16, #tpu.memory_space<vmem>>, %arg2: memref<2x16x128xbf16, #tpu.memory_space<vmem>>, %arg3: memref<3x128x128xbf16, #tpu.memory_space<vmem>>, %arg4: memref<1x128xf32, #tpu.memory_space<vmem>>, %arg5: memref<1x128xf32, #tpu.memory_space<vmem>>, %arg6: memref<128x512xbf16, #tpu.memory_space<vmem>>, %arg7: memref<128x512xbf16, #tpu.memory_space<vmem>>, %arg8: memref<1x512xf32, #tpu.memory_space<vmem>>, %arg9: memref<128x128xbf16, #tpu.memory_space<vmem>>, %arg10: memref<1x128xf32, #tpu.memory_space<vmem>>, %arg11: memref<1x2x128xf32, #tpu.memory_space<vmem>>, %arg12: memref<2x48x128xbf16, #tpu.memory_space<vmem>>, %arg13: memref<2x32x512xf32, #tpu.memory_space<vmem>>, %arg14: memref<2x32x128xbf16, #tpu.memory_space<vmem>>) attributes {dimension_semantics = [#tpu.dimension_semantics<parallel>], iteration_bounds = array<i64: 2>, scalar_prefetch = 0 : i64, scratch_operands = 3 : i64, tpu.core_type = #tpu.core_type<tc>, window_params = [{transform_indices = @transform_0, window_bounds = array<i64: 2, 32, 128>}, {transform_indices = @transform_1, window_bounds = array<i64: 2, 16, 128>}, {pipeline_mode = #tpu.pipeline_mode<synchronous>, transform_indices = @transform_2, window_bounds = array<i64: 3, 128, 128>}, {pipeline_mode = #tpu.pipeline_mode<synchronous>, transform_indices = @transform_3, window_bounds = array<i64: 1, 128>}, {pipeline_mode = #tpu.pipeline_mode<synchronous>, transform_indices = @transform_4, window_bounds = array<i64: 1, 128>}, {pipeline_mode = #tpu.pipeline_mode<synchronous>, transform_indices = @transform_5, window_bounds = array<i64: 128, 512>}, {pipeline_mode = #tpu.pipeline_mode<synchronous>, transform_indices = @transform_6, window_bounds = array<i64: 128, 512>}, {pipeline_mode = #tpu.pipeline_mode<synchronous>, transform_indices = @transform_7, window_bounds = array<i64: 1, 512>}, {pipeline_mode = #tpu.pipeline_mode<synchronous>, transform_indices = @transform_8, window_bounds = array<i64: 128, 128>}, {pipeline_mode = #tpu.pipeline_mode<synchronous>, transform_indices = @transform_9, window_bounds = array<i64: 1, 128>}, {transform_indices = @transform_10, window_bounds = array<i64: 1, 2, 128>}]} {
    %c0 = arith.constant 0 : index
    %c0_0 = arith.constant 0 : index
    %c0_1 = arith.constant 0 : index
    %0 = vector.load %arg1[%c0, %c0_0, %c0_1] : memref<2x32x128xbf16, #tpu.memory_space<vmem>>, vector<2x32x128xbf16>
    %c0_2 = arith.constant 0 : index
    %c0_3 = arith.constant 0 : index
    %c0_4 = arith.constant 0 : index
    %1 = vector.load %arg12[%c0_2, %c0_3, %c0_4] : memref<2x48x128xbf16, #tpu.memory_space<vmem>>, vector<2x32x128xbf16>
    tpu.vector_store %arg12[%c0_2, %c0_3, %c0_4], %0 {strides = array<i32>} : memref<2x48x128xbf16, #tpu.memory_space<vmem>>, vector<2x32x128xbf16>,
    %c0_5 = arith.constant 0 : index
    %c0_6 = arith.constant 0 : index
    %c0_7 = arith.constant 0 : index
    %2 = vector.load %arg2[%c0_5, %c0_6, %c0_7] : memref<2x16x128xbf16, #tpu.memory_space<vmem>>, vector<2x16x128xbf16>
    %c0_8 = arith.constant 0 : index
    %c32 = arith.constant 32 : index
    %c0_9 = arith.constant 0 : index
    %3 = vector.load %arg12[%c0_8, %c32, %c0_9] : memref<2x48x128xbf16, #tpu.memory_space<vmem>>, vector<2x16x128xbf16>
    tpu.vector_store %arg12[%c0_8, %c32, %c0_9], %2 {strides = array<i32>} : memref<2x48x128xbf16, #tpu.memory_space<vmem>>, vector<2x16x128xbf16>,
    %c0_10 = arith.constant 0 : index
    %c0_11 = arith.constant 0 : index
    %c0_12 = arith.constant 0 : index
    %4 = vector.load %arg12[%c0_10, %c0_11, %c0_12] : memref<2x48x128xbf16, #tpu.memory_space<vmem>>, vector<2x32x128xbf16>
    %5 = vector.shape_cast %4 : vector<2x32x128xbf16> to vector<64x128xbf16>
    %c0_13 = arith.constant 0 : index
    %c0_14 = arith.constant 0 : index
    %c0_15 = arith.constant 0 : index
    %6 = vector.load %arg3[%c0_13, %c0_14, %c0_15] : memref<3x128x128xbf16, #tpu.memory_space<vmem>>, vector<1x128x128xbf16>
    %7 = vector.shape_cast %6 : vector<1x128x128xbf16> to vector<128x128xbf16>
    %cst = arith.constant dense<0.000000e+00> : vector<64x128xf32>
    %8 = tpu.matmul %5, %7, %cst {dimension_numbers = #tpu.dot_dimension_numbers<[1], [0], [0], [1], [0, 0, 1, 1], [], []>} : vector<64x128xbf16>, vector<128x128xbf16>, vector<64x128xf32> -> vector<64x128xf32>
    %c0_16 = arith.constant 0 : index
    %c1 = arith.constant 1 : index
    %c0_17 = arith.constant 0 : index
    %9 = vector.load %arg12[%c0_16, %c1, %c0_17] : memref<2x48x128xbf16, #tpu.memory_space<vmem>>, vector<2x32x128xbf16>
    %10 = vector.shape_cast %9 : vector<2x32x128xbf16> to vector<64x128xbf16>
    %c1_18 = arith.constant 1 : index
    %c0_19 = arith.constant 0 : index
    %c0_20 = arith.constant 0 : index
    %11 = vector.load %arg3[%c1_18, %c0_19, %c0_20] : memref<3x128x128xbf16, #tpu.memory_space<vmem>>, vector<1x128x128xbf16>
    %12 = vector.shape_cast %11 : vector<1x128x128xbf16> to vector<128x128xbf16>
    %cst_21 = arith.constant dense<0.000000e+00> : vector<64x128xf32>
    %13 = tpu.matmul %10, %12, %cst_21 {dimension_numbers = #tpu.dot_dimension_numbers<[1], [0], [0], [1], [0, 0, 1, 1], [], []>} : vector<64x128xbf16>, vector<128x128xbf16>, vector<64x128xf32> -> vector<64x128xf32>
    %14 = arith.addf %8, %13 : vector<64x128xf32>
    %c0_22 = arith.constant 0 : index
    %c2 = arith.constant 2 : index
    %c0_23 = arith.constant 0 : index
    %15 = vector.load %arg12[%c0_22, %c2, %c0_23] : memref<2x48x128xbf16, #tpu.memory_space<vmem>>, vector<2x32x128xbf16>
    %16 = vector.shape_cast %15 : vector<2x32x128xbf16> to vector<64x128xbf16>
    %c2_24 = arith.constant 2 : index
    %c0_25 = arith.constant 0 : index
    %c0_26 = arith.constant 0 : index
    %17 = vector.load %arg3[%c2_24, %c0_25, %c0_26] : memref<3x128x128xbf16, #tpu.memory_space<vmem>>, vector<1x128x128xbf16>
    %18 = vector.shape_cast %17 : vector<1x128x128xbf16> to vector<128x128xbf16>
    %cst_27 = arith.constant dense<0.000000e+00> : vector<64x128xf32>
    %19 = tpu.matmul %16, %18, %cst_27 {dimension_numbers = #tpu.dot_dimension_numbers<[1], [0], [0], [1], [0, 0, 1, 1], [], []>} : vector<64x128xbf16>, vector<128x128xbf16>, vector<64x128xf32> -> vector<64x128xf32>
    %20 = arith.addf %14, %19 : vector<64x128xf32>
    %c0_28 = arith.constant 0 : index
    %c0_29 = arith.constant 0 : index
    %21 = vector.load %arg4[%c0_28, %c0_29] : memref<1x128xf32, #tpu.memory_space<vmem>>, vector<1x128xf32>
    %22 = vector.broadcast %21 : vector<1x128xf32> to vector<64x128xf32>
    %23 = arith.mulf %20, %22 : vector<64x128xf32>
    %c0_30 = arith.constant 0 : index
    %c0_31 = arith.constant 0 : index
    %24 = vector.load %arg5[%c0_30, %c0_31] : memref<1x128xf32, #tpu.memory_space<vmem>>, vector<1x128xf32>
    %25 = vector.broadcast %24 : vector<1x128xf32> to vector<64x128xf32>
    %26 = arith.addf %23, %25 : vector<64x128xf32>
    %cst_32 = arith.constant 0.000000e+00 : f32
    %27 = vector.broadcast %cst_32 : f32 to vector<64x128xf32>
    %28 = arith.maximumf %26, %27 : vector<64x128xf32>
    %29 = arith.truncf %28 : vector<64x128xf32> to vector<64x128xbf16>
    %c0_33 = arith.constant 0 : index
    %c0_34 = arith.constant 0 : index
    %30 = vector.load %arg6[%c0_33, %c0_34] : memref<128x512xbf16, #tpu.memory_space<vmem>>, vector<128x512xbf16>
    %cst_35 = arith.constant dense<0.000000e+00> : vector<64x512xf32>
    %31 = tpu.matmul %29, %30, %cst_35 {dimension_numbers = #tpu.dot_dimension_numbers<[1], [0], [0], [1], [0, 0, 1, 1], [], []>} : vector<64x128xbf16>, vector<128x512xbf16>, vector<64x512xf32> -> vector<64x512xf32>
    %c0_36 = arith.constant 0 : index
    %c0_37 = arith.constant 0 : index
    %32 = vector.load %arg8[%c0_36, %c0_37] : memref<1x512xf32, #tpu.memory_space<vmem>>, vector<1x512xf32>
    %33 = vector.broadcast %32 : vector<1x512xf32> to vector<64x512xf32>
    %34 = arith.addf %31, %33 : vector<64x512xf32>
    %35 = vector.shape_cast %34 : vector<64x512xf32> to vector<2x32x512xf32>
    %c0_38 = arith.constant 0 : index
    %c0_39 = arith.constant 0 : index
    %c0_40 = arith.constant 0 : index
    %36 = vector.load %arg13[%c0_38, %c0_39, %c0_40] : memref<2x32x512xf32, #tpu.memory_space<vmem>>, vector<2x32x512xf32>
    tpu.vector_store %arg13[%c0_38, %c0_39, %c0_40], %35 {strides = array<i32>} : memref<2x32x512xf32, #tpu.memory_space<vmem>>, vector<2x32x512xf32>,
    %c0_41 = arith.constant 0 : index
    %c0_42 = arith.constant 0 : index
    %37 = vector.load %arg7[%c0_41, %c0_42] : memref<128x512xbf16, #tpu.memory_space<vmem>>, vector<128x512xbf16>
    %cst_43 = arith.constant 0.000000e+00 : bf16
    %38 = vector.broadcast %cst_43 : bf16 to vector<32x128xbf16>
    %cst_44 = arith.constant 0.000000e+00 : f32
    %39 = vector.broadcast %cst_44 : f32 to vector<32x128xf32>
    %c0_i32 = arith.constant 0 : i32
    %40 = arith.index_cast %c0_i32 : i32 to index
    %c0_45 = arith.constant 0 : index
    %c0_46 = arith.constant 0 : index
    %41 = vector.load %arg13[%40, %c0_45, %c0_46] : memref<2x32x512xf32, #tpu.memory_space<vmem>>, vector<1x32x512xf32>
    %42 = vector.shape_cast %41 : vector<1x32x512xf32> to vector<32x512xf32>
    %cst_47 = arith.constant dense<0.000000e+00> : vector<32x512xf32>
    %43 = tpu.matmul %38, %37, %cst_47 {dimension_numbers = #tpu.dot_dimension_numbers<[1], [0], [0], [1], [0, 0, 1, 1], [], []>} : vector<32x128xbf16>, vector<128x512xbf16>, vector<32x512xf32> -> vector<32x512xf32>
    %44 = arith.addf %42, %43 : vector<32x512xf32>
    %45 = vector.extract_strided_slice %44 {offsets = [0, 0], sizes = [32, 128], strides = [1, 1]} : vector<32x512xf32> to vector<32x128xf32>
    %cst_48 = arith.constant 5.000000e-01 : f32
    %46 = vector.broadcast %cst_48 : f32 to vector<32x128xf32>
    %47 = arith.mulf %46, %45 : vector<32x128xf32>
    %48 = math.tanh %47 : vector<32x128xf32>
    %cst_49 = arith.constant 5.000000e-01 : f32
    %49 = vector.broadcast %cst_49 : f32 to vector<32x128xf32>
    %50 = arith.mulf %49, %48 : vector<32x128xf32>
    %cst_50 = arith.constant 5.000000e-01 : f32
    %51 = vector.broadcast %cst_50 : f32 to vector<32x128xf32>
    %52 = arith.addf %50, %51 : vector<32x128xf32>
    %53 = vector.extract_strided_slice %44 {offsets = [0, 128], sizes = [32, 128], strides = [1, 1]} : vector<32x512xf32> to vector<32x128xf32>
    %cst_51 = arith.constant 5.000000e-01 : f32
    %54 = vector.broadcast %cst_51 : f32 to vector<32x128xf32>
    %55 = arith.mulf %54, %53 : vector<32x128xf32>
    %56 = math.tanh %55 : vector<32x128xf32>
    %cst_52 = arith.constant 5.000000e-01 : f32
    %57 = vector.broadcast %cst_52 : f32 to vector<32x128xf32>
    %58 = arith.mulf %57, %56 : vector<32x128xf32>
    %cst_53 = arith.constant 5.000000e-01 : f32
    %59 = vector.broadcast %cst_53 : f32 to vector<32x128xf32>
    %60 = arith.addf %58, %59 : vector<32x128xf32>
    %61 = vector.extract_strided_slice %44 {offsets = [0, 256], sizes = [32, 128], strides = [1, 1]} : vector<32x512xf32> to vector<32x128xf32>
    %62 = math.tanh %61 : vector<32x128xf32>
    %63 = vector.extract_strided_slice %44 {offsets = [0, 384], sizes = [32, 128], strides = [1, 1]} : vector<32x512xf32> to vector<32x128xf32>
    %cst_54 = arith.constant 5.000000e-01 : f32
    %64 = vector.broadcast %cst_54 : f32 to vector<32x128xf32>
    %65 = arith.mulf %64, %63 : vector<32x128xf32>
    %66 = math.tanh %65 : vector<32x128xf32>
    %cst_55 = arith.constant 5.000000e-01 : f32
    %67 = vector.broadcast %cst_55 : f32 to vector<32x128xf32>
    %68 = arith.mulf %67, %66 : vector<32x128xf32>
    %cst_56 = arith.constant 5.000000e-01 : f32
    %69 = vector.broadcast %cst_56 : f32 to vector<32x128xf32>
    %70 = arith.addf %68, %69 : vector<32x128xf32>
    %71 = arith.mulf %60, %39 : vector<32x128xf32>
    %72 = arith.mulf %52, %62 : vector<32x128xf32>
    %73 = arith.addf %71, %72 : vector<32x128xf32>
    %74 = math.tanh %73 : vector<32x128xf32>
    %75 = arith.mulf %70, %74 : vector<32x128xf32>
    %76 = arith.truncf %75 : vector<32x128xf32> to vector<32x128xbf16>
    %77 = arith.index_cast %c0_i32 : i32 to index
    %c0_57 = arith.constant 0 : index
    %c0_58 = arith.constant 0 : index
    %78 = vector.load %arg14[%77, %c0_57, %c0_58] : memref<2x32x128xbf16, #tpu.memory_space<vmem>>, vector<1x32x128xbf16>
    %79 = vector.shape_cast %78 : vector<1x32x128xbf16> to vector<32x128xbf16>
    %80 = vector.shape_cast %76 : vector<32x128xbf16> to vector<1x32x128xbf16>
    tpu.vector_store %arg14[%77, %c0_57, %c0_58], %80 {strides = array<i32>} : memref<2x32x128xbf16, #tpu.memory_space<vmem>>, vector<1x32x128xbf16>,
    %c1_i32 = arith.constant 1 : i32
    %81 = arith.index_cast %c1_i32 : i32 to index
    %c0_59 = arith.constant 0 : index
    %c0_60 = arith.constant 0 : index
    %82 = vector.load %arg13[%81, %c0_59, %c0_60] : memref<2x32x512xf32, #tpu.memory_space<vmem>>, vector<1x32x512xf32>
    %83 = vector.shape_cast %82 : vector<1x32x512xf32> to vector<32x512xf32>
    %cst_61 = arith.constant dense<0.000000e+00> : vector<32x512xf32>
    %84 = tpu.matmul %76, %37, %cst_61 {dimension_numbers = #tpu.dot_dimension_numbers<[1], [0], [0], [1], [0, 0, 1, 1], [], []>} : vector<32x128xbf16>, vector<128x512xbf16>, vector<32x512xf32> -> vector<32x512xf32>
    %85 = arith.addf %83, %84 : vector<32x512xf32>
    %86 = vector.extract_strided_slice %85 {offsets = [0, 0], sizes = [32, 128], strides = [1, 1]} : vector<32x512xf32> to vector<32x128xf32>
    %cst_62 = arith.constant 5.000000e-01 : f32
    %87 = vector.broadcast %cst_62 : f32 to vector<32x128xf32>
    %88 = arith.mulf %87, %86 : vector<32x128xf32>
    %89 = math.tanh %88 : vector<32x128xf32>
    %cst_63 = arith.constant 5.000000e-01 : f32
    %90 = vector.broadcast %cst_63 : f32 to vector<32x128xf32>
    %91 = arith.mulf %90, %89 : vector<32x128xf32>
    %cst_64 = arith.constant 5.000000e-01 : f32
    %92 = vector.broadcast %cst_64 : f32 to vector<32x128xf32>
    %93 = arith.addf %91, %92 : vector<32x128xf32>
    %94 = vector.extract_strided_slice %85 {offsets = [0, 128], sizes = [32, 128], strides = [1, 1]} : vector<32x512xf32> to vector<32x128xf32>
    %cst_65 = arith.constant 5.000000e-01 : f32
    %95 = vector.broadcast %cst_65 : f32 to vector<32x128xf32>
    %96 = arith.mulf %95, %94 : vector<32x128xf32>
    %97 = math.tanh %96 : vector<32x128xf32>
    %cst_66 = arith.constant 5.000000e-01 : f32
    %98 = vector.broadcast %cst_66 : f32 to vector<32x128xf32>
    %99 = arith.mulf %98, %97 : vector<32x128xf32>
    %cst_67 = arith.constant 5.000000e-01 : f32
    %100 = vector.broadcast %cst_67 : f32 to vector<32x128xf32>
    %101 = arith.addf %99, %100 : vector<32x128xf32>
    %102 = vector.extract_strided_slice %85 {offsets = [0, 256], sizes = [32, 128], strides = [1, 1]} : vector<32x512xf32> to vector<32x128xf32>
    %103 = math.tanh %102 : vector<32x128xf32>
    %104 = vector.extract_strided_slice %85 {offsets = [0, 384], sizes = [32, 128], strides = [1, 1]} : vector<32x512xf32> to vector<32x128xf32>
    %cst_68 = arith.constant 5.000000e-01 : f32
    %105 = vector.broadcast %cst_68 : f32 to vector<32x128xf32>
    %106 = arith.mulf %105, %104 : vector<32x128xf32>
    %107 = math.tanh %106 : vector<32x128xf32>
    %cst_69 = arith.constant 5.000000e-01 : f32
    %108 = vector.broadcast %cst_69 : f32 to vector<32x128xf32>
    %109 = arith.mulf %108, %107 : vector<32x128xf32>
    %cst_70 = arith.constant 5.000000e-01 : f32
    %110 = vector.broadcast %cst_70 : f32 to vector<32x128xf32>
    %111 = arith.addf %109, %110 : vector<32x128xf32>
    %112 = arith.mulf %101, %73 : vector<32x128xf32>
    %113 = arith.mulf %93, %103 : vector<32x128xf32>
    %114 = arith.addf %112, %113 : vector<32x128xf32>
    %115 = math.tanh %114 : vector<32x128xf32>
    %116 = arith.mulf %111, %115 : vector<32x128xf32>
    %117 = arith.truncf %116 : vector<32x128xf32> to vector<32x128xbf16>
    %118 = arith.index_cast %c1_i32 : i32 to index
    %c0_71 = arith.constant 0 : index
    %c0_72 = arith.constant 0 : index
    %119 = vector.load %arg14[%118, %c0_71, %c0_72] : memref<2x32x128xbf16, #tpu.memory_space<vmem>>, vector<1x32x128xbf16>
    %120 = vector.shape_cast %119 : vector<1x32x128xbf16> to vector<32x128xbf16>
    %121 = vector.shape_cast %117 : vector<32x128xbf16> to vector<1x32x128xbf16>
    tpu.vector_store %arg14[%118, %c0_71, %c0_72], %121 {strides = array<i32>} : memref<2x32x128xbf16, #tpu.memory_space<vmem>>, vector<1x32x128xbf16>,
    %c2_i32 = arith.constant 2 : i32
    %c0_73 = arith.constant 0 : index
    %c0_74 = arith.constant 0 : index
    %c0_75 = arith.constant 0 : index
    %122 = vector.load %arg14[%c0_73, %c0_74, %c0_75] : memref<2x32x128xbf16, #tpu.memory_space<vmem>>, vector<2x32x128xbf16>
    %123 = vector.shape_cast %122 : vector<2x32x128xbf16> to vector<64x128xbf16>
    %c0_76 = arith.constant 0 : index
    %c0_77 = arith.constant 0 : index
    %124 = vector.load %arg9[%c0_76, %c0_77] : memref<128x128xbf16, #tpu.memory_space<vmem>>, vector<128x128xbf16>
    %cst_78 = arith.constant dense<0.000000e+00> : vector<64x128xf32>
    %125 = tpu.matmul %123, %124, %cst_78 {dimension_numbers = #tpu.dot_dimension_numbers<[1], [0], [0], [1], [0, 0, 1, 1], [], []>} : vector<64x128xbf16>, vector<128x128xbf16>, vector<64x128xf32> -> vector<64x128xf32>
    %c0_79 = arith.constant 0 : index
    %c0_80 = arith.constant 0 : index
    %126 = vector.load %arg10[%c0_79, %c0_80] : memref<1x128xf32, #tpu.memory_space<vmem>>, vector<1x128xf32>
    %127 = vector.broadcast %126 : vector<1x128xf32> to vector<64x128xf32>
    %128 = arith.addf %125, %127 : vector<64x128xf32>
    %cst_81 = arith.constant 0.000000e+00 : f32
    %129 = vector.broadcast %cst_81 : f32 to vector<64x128xf32>
    %130 = arith.cmpf ogt, %128, %129 : vector<64x128xf32>
    %cst_82 = arith.constant 0.000000e+00 : f32
    %131 = vector.broadcast %cst_82 : f32 to vector<64x128xf32>
    %132 = arith.minimumf %128, %131 : vector<64x128xf32>
    %133 = math.exp %132 : vector<64x128xf32>
    %cst_83 = arith.constant 1.000000e+00 : f32
    %134 = vector.broadcast %cst_83 : f32 to vector<64x128xf32>
    %135 = arith.subf %133, %134 : vector<64x128xf32>
    %136 = arith.select %130, %128, %135 : vector<64x128xi1>, vector<64x128xf32>
    %137 = vector.shape_cast %136 : vector<64x128xf32> to vector<2x32x128xf32>
    %c1_i32_84 = arith.constant 1 : i32
    %138 = arith.cmpi eq, %arg0, %c1_i32_84 : i32
    %139 = arith.extui %138 : i1 to i32
    %c0_i32_85 = arith.constant 0 : i32
    %140 = arith.cmpi ne, %139, %c0_i32_85 : i32
    scf.if %140 {
      %144 = tpu.iota {dimensions = array<i32: 1>} : vector<2x32x128xi32>
      %c2_i32_87 = arith.constant 2 : i32
      %145 = vector.broadcast %c2_i32_87 : i32 to vector<2x32x128xi32>
      %146 = arith.cmpi slt, %144, %145 : vector<2x32x128xi32>
      %cst_88 = arith.constant 0.000000e+00 : f32
      %147 = vector.broadcast %cst_88 : f32 to vector<2x32x128xf32>
      %148 = arith.select %146, %137, %147 : vector<2x32x128xi1>, vector<2x32x128xf32>
      %cst_89 = arith.constant dense<0.000000e+00> : vector<2x128xf32>
      %149 = vector.multi_reduction <add>, %148, %cst_89 [1] : vector<2x32x128xf32> to vector<2x128xf32>
      %150 = vector.shape_cast %149 : vector<2x128xf32> to vector<1x2x128xf32>
      %c0_90 = arith.constant 0 : index
      %c0_91 = arith.constant 0 : index
      %c0_92 = arith.constant 0 : index
      %151 = vector.load %arg11[%c0_90, %c0_91, %c0_92] : memref<1x2x128xf32, #tpu.memory_space<vmem>>, vector<1x2x128xf32>
      tpu.vector_store %arg11[%c0_90, %c0_91, %c0_92], %150 {strides = array<i32>} : memref<1x2x128xf32, #tpu.memory_space<vmem>>, vector<1x2x128xf32>,
    } else {
    }
    %true = arith.constant true
    %141 = arith.xori %138, %true : i1
    %142 = arith.extui %141 : i1 to i32
    %c0_i32_86 = arith.constant 0 : i32
    %143 = arith.cmpi ne, %142, %c0_i32_86 : i32
    scf.if %143 {
      %cst_87 = arith.constant dense<0.000000e+00> : vector<2x128xf32>
      %144 = vector.multi_reduction <add>, %137, %cst_87 [1] : vector<2x32x128xf32> to vector<2x128xf32>
      %145 = vector.shape_cast %144 : vector<2x128xf32> to vector<1x2x128xf32>
      %c0_88 = arith.constant 0 : index
      %c0_89 = arith.constant 0 : index
      %c0_90 = arith.constant 0 : index
      %146 = vector.load %arg11[%c0_88, %c0_89, %c0_90] : memref<1x2x128xf32, #tpu.memory_space<vmem>>, vector<1x2x128xf32>
      tpu.vector_store %arg11[%c0_88, %c0_89, %c0_90], %145 {strides = array<i32>} : memref<1x2x128xf32, #tpu.memory_space<vmem>>, vector<1x2x128xf32>,
    } else {
    }
    return
  }
  func.func @transform_0(%arg0: i32) -> (i32, i32, i32) {
    %c0_i32 = arith.constant 0 : i32
    %c0_i32_0 = arith.constant 0 : i32
    %c0_i32_1 = arith.constant 0 : i32
    return %c0_i32, %arg0, %c0_i32_0 : i32, i32, i32
  }
  func.func @transform_1(%arg0: i32) -> (i32, i32, i32) {
    %c1_i32 = arith.constant 1 : i32
    %0 = arith.addi %arg0, %c1_i32 : i32
    %c2_i32 = arith.constant 2 : i32
    %1 = arith.muli %0, %c2_i32 : i32
    %c0_i32 = arith.constant 0 : i32
    %c0_i32_0 = arith.constant 0 : i32
    %c0_i32_1 = arith.constant 0 : i32
    return %c0_i32, %1, %c0_i32_0 : i32, i32, i32
  }
  func.func @transform_2(%arg0: i32) -> (i32, i32, i32) {
    %c0_i32 = arith.constant 0 : i32
    %c0_i32_0 = arith.constant 0 : i32
    %c0_i32_1 = arith.constant 0 : i32
    %c0_i32_2 = arith.constant 0 : i32
    return %c0_i32, %c0_i32_0, %c0_i32_1 : i32, i32, i32
  }
  func.func @transform_3(%arg0: i32) -> (i32, i32) {
    %c0_i32 = arith.constant 0 : i32
    %c0_i32_0 = arith.constant 0 : i32
    %c0_i32_1 = arith.constant 0 : i32
    return %c0_i32, %c0_i32_0 : i32, i32
  }
  func.func @transform_4(%arg0: i32) -> (i32, i32) {
    %c0_i32 = arith.constant 0 : i32
    %c0_i32_0 = arith.constant 0 : i32
    %c0_i32_1 = arith.constant 0 : i32
    return %c0_i32, %c0_i32_0 : i32, i32
  }
  func.func @transform_5(%arg0: i32) -> (i32, i32) {
    %c0_i32 = arith.constant 0 : i32
    %c0_i32_0 = arith.constant 0 : i32
    %c0_i32_1 = arith.constant 0 : i32
    return %c0_i32, %c0_i32_0 : i32, i32
  }
  func.func @transform_6(%arg0: i32) -> (i32, i32) {
    %c0_i32 = arith.constant 0 : i32
    %c0_i32_0 = arith.constant 0 : i32
    %c0_i32_1 = arith.constant 0 : i32
    return %c0_i32, %c0_i32_0 : i32, i32
  }
  func.func @transform_7(%arg0: i32) -> (i32, i32) {
    %c0_i32 = arith.constant 0 : i32
    %c0_i32_0 = arith.constant 0 : i32
    %c0_i32_1 = arith.constant 0 : i32
    return %c0_i32, %c0_i32_0 : i32, i32
  }
  func.func @transform_8(%arg0: i32) -> (i32, i32) {
    %c0_i32 = arith.constant 0 : i32
    %c0_i32_0 = arith.constant 0 : i32
    %c0_i32_1 = arith.constant 0 : i32
    return %c0_i32, %c0_i32_0 : i32, i32
  }
  func.func @transform_9(%arg0: i32) -> (i32, i32) {
    %c0_i32 = arith.constant 0 : i32
    %c0_i32_0 = arith.constant 0 : i32
    %c0_i32_1 = arith.constant 0 : i32
    return %c0_i32, %c0_i32_0 : i32, i32
  }
  func.func @transform_10(%arg0: i32) -> (i32, i32, i32) {
    %c0_i32 = arith.constant 0 : i32
    %c0_i32_0 = arith.constant 0 : i32
    %c0_i32_1 = arith.constant 0 : i32
    return %arg0, %c0_i32, %c0_i32_0 : i32, i32, i32
  }
}

</mosaic_0001>

<llo_original>
// kernel: tpu_custom_call.1
$region0: #{tpu_custom_call.1}
  #allocation0 [shape = 'u32[]', space=smem, size = 0x4, offset = 0x4, fixed_abs, tag = 'smem constant byte address 0x4 - core index']
  #allocation1 [shape = 'u32[144,128]{1,0:T(1,128)}', space=vmem, size = 0x12000, scoped, tag = 'internal scratch']
  #allocation2 [shape = 'bf16[2,48,128]{2,1,0:T(16,128)(2,1)}', space=vmem, size = 0x6000, scoped, tag = 'scratch operand']
  #allocation3 [shape = 'f32[2,32,512]{2,1,0:T(8,128)}', space=vmem, size = 0x20000, scoped, tag = 'scratch operand']
  #allocation4 [shape = 'bf16[2,32,128]{2,1,0:T(16,128)(2,1)}', space=vmem, size = 0x4000, scoped, tag = 'scratch operand']
  #allocation23 [shape = 's32[]', space=sflag, size = 0x4, offset = 0, fixed_abs, tag = 'sflag constant byte address 0x0 - dummy sync flag']
  #allocation25 [shape = 's32[]', space=sflag, size = 0x4, offset = 0, fixed_abs, tag = 'sflag constant byte address 0x0 - dummy sync flag']
  %s0 = inlined_call_operand.hbm [shape: bf16[2,80,128], index: 0, kind: input, shape index: {}]
  %s1 = inlined_call_operand.hbm [shape: bf16[2,80,128], index: 1, kind: input, shape index: {}]
  %s2 = inlined_call_operand.hbm [shape: bf16[3,128,128], index: 2, kind: input, shape index: {}]
  %s3 = inlined_call_operand.hbm [shape: f32[1,128], index: 3, kind: input, shape index: {}]
  %s4 = inlined_call_operand.hbm [shape: f32[1,128], index: 4, kind: input, shape index: {}]
  %s5 = inlined_call_operand.hbm [shape: bf16[128,512], index: 5, kind: input, shape index: {}]
  %s6 = inlined_call_operand.hbm [shape: bf16[128,512], index: 6, kind: input, shape index: {}]
  %s7 = inlined_call_operand.hbm [shape: f32[1,512], index: 7, kind: input, shape index: {}]
  %s8 = inlined_call_operand.hbm [shape: bf16[128,128], index: 8, kind: input, shape index: {}]
  %s9 = inlined_call_operand.hbm [shape: f32[1,128], index: 9, kind: input, shape index: {}]
  %s10 = inlined_call_operand.hbm [shape: f32[2,2,128], index: 10, kind: output, shape index: {}]
  %s11 = sld [smem:[#allocation0]]
  $region121: #{tpu_custom_call.1} parent=0
    _
  %s13 = ssub.s32 1, %s11
  %s14 = scalar_select 0, %s13, %s11
  $region1: #{tpu_custom_call.1} parent=0
    #allocation5 [shape = 'u8[32768]{0}', space=vmem, size = 0x8000, scoped, tag = 'input window, operand 0']
    #allocation6 [shape = 's32[2]{0}', space=sflag, size = 0x8, scoped, tag = 'scoped memory for tpu_custom_call.1']
    #allocation7 [shape = 's32[2]{0}', space=sflag, size = 0x8, scoped, tag = 'scoped memory for tpu_custom_call.1']
    #allocation8 [shape = 'u8[16384]{0}', space=vmem, size = 0x4000, scoped, tag = 'input window, operand 1']
    #allocation9 [shape = 's32[2]{0}', space=sflag, size = 0x8, scoped, tag = 'scoped memory for tpu_custom_call.1']
    #allocation10 [shape = 'u8[98304]{0}', space=vmem, size = 0x18000, scoped, tag = 'input window, operand 2, single buffered']
    #allocation11 [shape = 'u8[512]{0}', space=vmem, size = 0x400, scoped, tag = 'input window, operand 3, single buffered']
    #allocation12 [shape = 's32[1]{0}', space=sflag, size = 0x4, scoped, tag = 'scoped memory for tpu_custom_call.1']
    #allocation13 [shape = 'u8[512]{0}', space=vmem, size = 0x400, scoped, tag = 'input window, operand 4, single buffered']
    #allocation14 [shape = 'u8[131072]{0}', space=vmem, size = 0x20000, scoped, tag = 'input window, operand 5, single buffered']
    #allocation15 [shape = 's32[1]{0}', space=sflag, size = 0x4, scoped, tag = 'scoped memory for tpu_custom_call.1']
    #allocation16 [shape = 'u8[131072]{0}', space=vmem, size = 0x20000, scoped, tag = 'input window, operand 6, single buffered']
    #allocation17 [shape = 'u8[2048]{0}', space=vmem, size = 0x800, scoped, tag = 'input window, operand 7, single buffered']
    #allocation18 [shape = 's32[1]{0}', space=sflag, size = 0x4, scoped, tag = 'scoped memory for tpu_custom_call.1']
    #allocation19 [shape = 'u8[32768]{0}', space=vmem, size = 0x8000, scoped, tag = 'input window, operand 8, single buffered']
    #allocation20 [shape = 'u8[512]{0}', space=vmem, size = 0x400, scoped, tag = 'input window, operand 9, single buffered']
    #allocation21 [shape = 's32[1]{0}', space=sflag, size = 0x4, scoped, tag = 'scoped memory for tpu_custom_call.1']
    #allocation22 [shape = 'u8[2048]{0}', space=vmem, size = 0x800, scoped, tag = 'output window, operand 0']
    %15 = vsyncpa [#allocation6], 0
    %s16 = scalar_lea.sflag [#allocation6], 1
    %17 = vsyncpa %s16, 0
    %18 = vsyncpa [#allocation9], 0
    %s19 = scalar_lea.sflag [#allocation9], 1
    %20 = vsyncpa %s19, 0
    %21 = vsyncpa [#allocation12], 0
    %22 = vsyncpa [#allocation15], 0
    %23 = vsyncpa [#allocation18], 0
    %24 = vsyncpa [#allocation21], 0
    %25 = vsyncpa [#allocation7], 0
    %s26 = scalar_lea.sflag [#allocation7], 1
    %27 = vsyncpa %s26, 0
    loop: start=0, step=1, limit=4
    $region2: #{tpu_custom_call.1} parent=1 // loop_pre_header
      _
    $region3: #{tpu_custom_call.1} parent=1 // loop_header
      %s29 = sphi 0, %s33
      %p30 = scmp.ge.s32.totalorder %s29, 4
      %s39 = sphi 0, %s41
      %s42 = sphi 0, %s39
      %s43 = sphi 0, %s42
      %s59 = sphi 0, %s43
      %s69 = sphi 0, %s71
      %s72 = sphi 0, %s69
      %s73 = sphi 0, %s72
      %s89 = sphi 0, %s73
      %s93 = sphi 0, %s93
      %s95 = sphi 0, %s93
      %s96 = sphi 0, %s95
      %s110 = sphi 0, %s96
      %s114 = sphi 0, %s114
      %s116 = sphi 0, %s114
      %s117 = sphi 0, %s116
      %s131 = sphi 0, %s117
      %s135 = sphi 0, %s135
      %s137 = sphi 0, %s135
      %s138 = sphi 0, %s137
      %s152 = sphi 0, %s138
      %s156 = sphi 0, %s156
      %s158 = sphi 0, %s156
      %s159 = sphi 0, %s158
      %s173 = sphi 0, %s159
      %s177 = sphi 0, %s177
      %s179 = sphi 0, %s177
      %s180 = sphi 0, %s179
      %s194 = sphi 0, %s180
      %s198 = sphi 0, %s198
      %s200 = sphi 0, %s198
      %s201 = sphi 0, %s200
      %s215 = sphi 0, %s201
      %s219 = sphi 0, %s219
      %s221 = sphi 0, %s219
      %s222 = sphi 0, %s221
      %s236 = sphi 0, %s222
      %s240 = sphi 0, %s240
      %s242 = sphi 0, %s240
      %s243 = sphi 0, %s242
      %s257 = sphi 0, %s243
      %s263 = sphi 0, %s265
      %s266 = sphi 0, %s263
      %s267 = sphi 0, %s266
      %s283 = sphi 0, %s267
    $region4: #{tpu_custom_call.1} parent=1 // loop_header_branch
      %32 = sbr.rel (%p30) target = $region8
    $region5: #{tpu_custom_call.1} parent=1 // loop_body
      %s34 = ssub.s32 %s29, 1
      %s35 = ssub.s32 %s29, 2
      %s36 = sadd.s32 %s29, 1
      %s37 = ssub.s32 %s29, %s36
      %p38 = scmp.eq.s32.totalorder %s37, 0
      %s40 = sadd.s32 %s39, 1
      %s41 = scalar_select %p38, %s39, %s40
      %p44 = pneg %p38
      %p45 = scmp.eq.s32.totalorder %s29, 1
      %p46 = por %p44, %p45
      %p47 = scmp.ne.s32.totalorder %s39, %s42
      %p48 = scmp.eq.s32.totalorder %s29, 0
      %p49 = por %p47, %p48
      %p50 = scmp.ne.s32.totalorder %s39, %s42
      %p51 = scmp.eq.s32.totalorder %s34, 1
      %p52 = por %p50, %p51
      %p53 = scmp.ne.s32.totalorder %s42, %s43
      %p54 = scmp.eq.s32.totalorder %s34, 0
      %p55 = por %p53, %p54
      %p56 = scmp.ne.s32.totalorder %s42, %s43
      %p57 = scmp.eq.s32.totalorder %s35, 1
      %p58 = por %p56, %p57
      %p60 = scmp.ne.s32.totalorder %s43, %s59
      %p61 = scmp.eq.s32.totalorder %s35, 0
      %p62 = por %p60, %p61
      %s63 = sadd.s32 %s29, 1
      %s64 = smul.u32 %s63, 2
      %s65 = sadd.s32 %s36, 1
      %s66 = smul.u32 %s65, 2
      %s67 = ssub.s32 %s64, %s66
      %p68 = scmp.eq.s32.totalorder %s67, 0
      %s70 = sadd.s32 %s69, 1
      %s71 = scalar_select %p68, %s69, %s70
      %p74 = pneg %p68
      %p75 = scmp.eq.s32.totalorder %s29, 1
      %p76 = por %p74, %p75
      %p77 = scmp.ne.s32.totalorder %s69, %s72
      %p78 = scmp.eq.s32.totalorder %s29, 0
      %p79 = por %p77, %p78
      %p80 = scmp.ne.s32.totalorder %s69, %s72
      %p81 = scmp.eq.s32.totalorder %s34, 1
      %p82 = por %p80, %p81
      %p83 = scmp.ne.s32.totalorder %s72, %s73
      %p84 = scmp.eq.s32.totalorder %s34, 0
      %p85 = por %p83, %p84
      %p86 = scmp.ne.s32.totalorder %s72, %s73
      %p87 = scmp.eq.s32.totalorder %s35, 1
      %p88 = por %p86, %p87
      %p90 = scmp.ne.s32.totalorder %s73, %s89
      %p91 = scmp.eq.s32.totalorder %s35, 0
      %p92 = por %p90, %p91
      %s94 = sadd.s32 %s93, 1
      %p97 = scmp.eq.s32.totalorder %s29, 1
      %p98 = scmp.ne.s32.totalorder %s93, %s95
      %p99 = scmp.eq.s32.totalorder %s29, 0
      %p100 = por %p98, %p99
      %p101 = scmp.ne.s32.totalorder %s93, %s95
      %p102 = scmp.eq.s32.totalorder %s34, 1
      %p103 = por %p101, %p102
      %p104 = scmp.ne.s32.totalorder %s95, %s96
      %p105 = scmp.eq.s32.totalorder %s34, 0
      %p106 = por %p104, %p105
      %p107 = scmp.ne.s32.totalorder %s95, %s96
      %p108 = scmp.eq.s32.totalorder %s35, 1
      %p109 = por %p107, %p108
      %p111 = scmp.ne.s32.totalorder %s96, %s110
      %p112 = scmp.eq.s32.totalorder %s35, 0
      %p113 = por %p111, %p112
      %s115 = sadd.s32 %s114, 1
      %p118 = scmp.eq.s32.totalorder %s29, 1
      %p119 = scmp.ne.s32.totalorder %s114, %s116
      %p120 = scmp.eq.s32.totalorder %s29, 0
      %p121 = por %p119, %p120
      %p122 = scmp.ne.s32.totalorder %s114, %s116
      %p123 = scmp.eq.s32.totalorder %s34, 1
      %p124 = por %p122, %p123
      %p125 = scmp.ne.s32.totalorder %s116, %s117
      %p126 = scmp.eq.s32.totalorder %s34, 0
      %p127 = por %p125, %p126
      %p128 = scmp.ne.s32.totalorder %s116, %s117
      %p129 = scmp.eq.s32.totalorder %s35, 1
      %p130 = por %p128, %p129
      %p132 = scmp.ne.s32.totalorder %s117, %s131
      %p133 = scmp.eq.s32.totalorder %s35, 0
      %p134 = por %p132, %p133
      %s136 = sadd.s32 %s135, 1
      %p139 = scmp.eq.s32.totalorder %s29, 1
      %p140 = scmp.ne.s32.totalorder %s135, %s137
      %p141 = scmp.eq.s32.totalorder %s29, 0
      %p142 = por %p140, %p141
      %p143 = scmp.ne.s32.totalorder %s135, %s137
      %p144 = scmp.eq.s32.totalorder %s34, 1
      %p145 = por %p143, %p144
      %p146 = scmp.ne.s32.totalorder %s137, %s138
      %p147 = scmp.eq.s32.totalorder %s34, 0
      %p148 = por %p146, %p147
      %p149 = scmp.ne.s32.totalorder %s137, %s138
      %p150 = scmp.eq.s32.totalorder %s35, 1
      %p151 = por %p149, %p150
      %p153 = scmp.ne.s32.totalorder %s138, %s152
      %p154 = scmp.eq.s32.totalorder %s35, 0
      %p155 = por %p153, %p154
      %s157 = sadd.s32 %s156, 1
      %p160 = scmp.eq.s32.totalorder %s29, 1
      %p161 = scmp.ne.s32.totalorder %s156, %s158
      %p162 = scmp.eq.s32.totalorder %s29, 0
      %p163 = por %p161, %p162
      %p164 = scmp.ne.s32.totalorder %s156, %s158
      %p165 = scmp.eq.s32.totalorder %s34, 1
      %p166 = por %p164, %p165
      %p167 = scmp.ne.s32.totalorder %s158, %s159
      %p168 = scmp.eq.s32.totalorder %s34, 0
      %p169 = por %p167, %p168
      %p170 = scmp.ne.s32.totalorder %s158, %s159
      %p171 = scmp.eq.s32.totalorder %s35, 1
      %p172 = por %p170, %p171
      %p174 = scmp.ne.s32.totalorder %s159, %s173
      %p175 = scmp.eq.s32.totalorder %s35, 0
      %p176 = por %p174, %p175
      %s178 = sadd.s32 %s177, 1
      %p181 = scmp.eq.s32.totalorder %s29, 1
      %p182 = scmp.ne.s32.totalorder %s177, %s179
      %p183 = scmp.eq.s32.totalorder %s29, 0
      %p184 = por %p182, %p183
      %p185 = scmp.ne.s32.totalorder %s177, %s179
      %p186 = scmp.eq.s32.totalorder %s34, 1
      %p187 = por %p185, %p186
      %p188 = scmp.ne.s32.totalorder %s179, %s180
      %p189 = scmp.eq.s32.totalorder %s34, 0
      %p190 = por %p188, %p189
      %p191 = scmp.ne.s32.totalorder %s179, %s180
      %p192 = scmp.eq.s32.totalorder %s35, 1
      %p193 = por %p191, %p192
      %p195 = scmp.ne.s32.totalorder %s180, %s194
      %p196 = scmp.eq.s32.totalorder %s35, 0
      %p197 = por %p195, %p196
      %s199 = sadd.s32 %s198, 1
      %p202 = scmp.eq.s32.totalorder %s29, 1
      %p203 = scmp.ne.s32.totalorder %s198, %s200
      %p204 = scmp.eq.s32.totalorder %s29, 0
      %p205 = por %p203, %p204
      %p206 = scmp.ne.s32.totalorder %s198, %s200
      %p207 = scmp.eq.s32.totalorder %s34, 1
      %p208 = por %p206, %p207
      %p209 = scmp.ne.s32.totalorder %s200, %s201
      %p210 = scmp.eq.s32.totalorder %s34, 0
      %p211 = por %p209, %p210
      %p212 = scmp.ne.s32.totalorder %s200, %s201
      %p213 = scmp.eq.s32.totalorder %s35, 1
      %p214 = por %p212, %p213
      %p216 = scmp.ne.s32.totalorder %s201, %s215
      %p217 = scmp.eq.s32.totalorder %s35, 0
      %p218 = por %p216, %p217
      %s220 = sadd.s32 %s219, 1
      %p223 = scmp.eq.s32.totalorder %s29, 1
      %p224 = scmp.ne.s32.totalorder %s219, %s221
      %p225 = scmp.eq.s32.totalorder %s29, 0
      %p226 = por %p224, %p225
      %p227 = scmp.ne.s32.totalorder %s219, %s221
      %p228 = scmp.eq.s32.totalorder %s34, 1
      %p229 = por %p227, %p228
      %p230 = scmp.ne.s32.totalorder %s221, %s222
      %p231 = scmp.eq.s32.totalorder %s34, 0
      %p232 = por %p230, %p231
      %p233 = scmp.ne.s32.totalorder %s221, %s222
      %p234 = scmp.eq.s32.totalorder %s35, 1
      %p235 = por %p233, %p234
      %p237 = scmp.ne.s32.totalorder %s222, %s236
      %p238 = scmp.eq.s32.totalorder %s35, 0
      %p239 = por %p237, %p238
      %s241 = sadd.s32 %s240, 1
      %p244 = scmp.eq.s32.totalorder %s29, 1
      %p245 = scmp.ne.s32.totalorder %s240, %s242
      %p246 = scmp.eq.s32.totalorder %s29, 0
      %p247 = por %p245, %p246
      %p248 = scmp.ne.s32.totalorder %s240, %s242
      %p249 = scmp.eq.s32.totalorder %s34, 1
      %p250 = por %p248, %p249
      %p251 = scmp.ne.s32.totalorder %s242, %s243
      %p252 = scmp.eq.s32.totalorder %s34, 0
      %p253 = por %p251, %p252
      %p254 = scmp.ne.s32.totalorder %s242, %s243
      %p255 = scmp.eq.s32.totalorder %s35, 1
      %p256 = por %p254, %p255
      %p258 = scmp.ne.s32.totalorder %s243, %s257
      %p259 = scmp.eq.s32.totalorder %s35, 0
      %p260 = por %p258, %p259
      %s261 = ssub.s32 %s29, %s36
      %p262 = scmp.eq.s32.totalorder %s261, 0
      %s264 = sadd.s32 %s263, 1
      %s265 = scalar_select %p262, %s263, %s264
      %p268 = pneg %p262
      %p269 = scmp.eq.s32.totalorder %s29, 1
      %p270 = por %p268, %p269
      %p271 = scmp.ne.s32.totalorder %s263, %s266
      %p272 = scmp.eq.s32.totalorder %s29, 0
      %p273 = por %p271, %p272
      %p274 = scmp.ne.s32.totalorder %s263, %s266
      %p275 = scmp.eq.s32.totalorder %s34, 1
      %p276 = por %p274, %p275
      %p277 = scmp.ne.s32.totalorder %s266, %s267
      %p278 = scmp.eq.s32.totalorder %s34, 0
      %p279 = por %p277, %p278
      %p280 = scmp.ne.s32.totalorder %s266, %s267
      %p281 = scmp.eq.s32.totalorder %s35, 1
      %p282 = por %p280, %p281
      %p284 = scmp.ne.s32.totalorder %s267, %s283
      %p285 = scmp.eq.s32.totalorder %s35, 0
      %p286 = por %p284, %p285
      %p287 = scmp.le.s32.totalorder 1, %s29
      %p288 = scmp.lt.s32.totalorder %s29, 3
      %p289 = pnand %p287, %p288
      %p290 = pneg %p289
      // Predicated region
      $region9: #{tpu_custom_call.1} parent=5 // pred_check
        _
      $region10: #{tpu_custom_call.1} parent=5 // pred_check_branch
        %292 = sbr.rel (%p289) target = $region12
      $region11: #{tpu_custom_call.1} parent=5 // pred_region
        %s293 = ssub.s32 %s29, 1
        // Predicated region
        $region13: #{tpu_custom_call.1} parent=11 // pred_check
          %p294 = pneg %p106
        $region14: #{tpu_custom_call.1} parent=11 // pred_check_branch
          %296 = sbr.rel (%p294) target = $region16
        $region15: #{tpu_custom_call.1} parent=11 // pred_region
          %s298 = ssub.s32 3072, 3072
          %299 = vsyncadd [#allocation9], %s298
          %s300 = sshll.u32 [#allocation10], 4
          %s301 = int_to_ptr.vmem [resolvable:$true] %s300
          %306 = dma.hbm_to_vmem [thread:$0]  %s2, 3072, %s301, [#allocation9], 64, 64, 4
        $region16: #{tpu_custom_call.1} parent=11 // pred_fallthru
          _
        // Predicated region
        $region17: #{tpu_custom_call.1} parent=11 // pred_check
          %p307 = pneg %p127
        $region18: #{tpu_custom_call.1} parent=11 // pred_check_branch
          %309 = sbr.rel (%p307) target = $region20
        $region19: #{tpu_custom_call.1} parent=11 // pred_region
          %s311 = ssub.s32 16, 16
          %312 = vsyncadd [#allocation12], %s311
          %s314 = sshll.u32 [#allocation11], 4
          %s315 = int_to_ptr.vmem [resolvable:$true] %s314
          %317 = dma.hbm_to_vmem [thread:$0]  %s3, 16, %s315, [#allocation12]
        $region20: #{tpu_custom_call.1} parent=11 // pred_fallthru
          _
        // Predicated region
        $region21: #{tpu_custom_call.1} parent=11 // pred_check
          %p318 = pneg %p148
        $region22: #{tpu_custom_call.1} parent=11 // pred_check_branch
          %320 = sbr.rel (%p318) target = $region24
        $region23: #{tpu_custom_call.1} parent=11 // pred_region
          %s322 = ssub.s32 16, 16
          %323 = vsyncadd [#allocation12], %s322
          %s325 = sshll.u32 [#allocation13], 4
          %s326 = int_to_ptr.vmem [resolvable:$true] %s325
          %328 = dma.hbm_to_vmem [thread:$0]  %s4, 16, %s326, [#allocation12]
        $region24: #{tpu_custom_call.1} parent=11 // pred_fallthru
          _
        // Predicated region
        $region25: #{tpu_custom_call.1} parent=11 // pred_check
          %p329 = pneg %p169
        $region26: #{tpu_custom_call.1} parent=11 // pred_check_branch
          %331 = sbr.rel (%p329) target = $region28
        $region27: #{tpu_custom_call.1} parent=11 // pred_region
          %s333 = ssub.s32 4096, 4096
          %334 = vsyncadd [#allocation15], %s333
          %s335 = sshll.u32 [#allocation14], 4
          %s336 = int_to_ptr.vmem [resolvable:$true] %s335
          %341 = dma.hbm_to_vmem [thread:$0]  %s5, 4096, %s336, [#allocation15], 256, 256, 16
        $region28: #{tpu_custom_call.1} parent=11 // pred_fallthru
          _
        // Predicated region
        $region29: #{tpu_custom_call.1} parent=11 // pred_check
          %p342 = pneg %p190
        $region30: #{tpu_custom_call.1} parent=11 // pred_check_branch
          %344 = sbr.rel (%p342) target = $region32
        $region31: #{tpu_custom_call.1} parent=11 // pred_region
          %s346 = ssub.s32 4096, 4096
          %347 = vsyncadd [#allocation15], %s346
          %s348 = sshll.u32 [#allocation16], 4
          %s349 = int_to_ptr.vmem [resolvable:$true] %s348
          %354 = dma.hbm_to_vmem [thread:$0]  %s6, 4096, %s349, [#allocation15], 256, 256, 16
        $region32: #{tpu_custom_call.1} parent=11 // pred_fallthru
          _
        // Predicated region
        $region33: #{tpu_custom_call.1} parent=11 // pred_check
          %p355 = pneg %p211
        $region34: #{tpu_custom_call.1} parent=11 // pred_check_branch
          %357 = sbr.rel (%p355) target = $region36
        $region35: #{tpu_custom_call.1} parent=11 // pred_region
          %s359 = ssub.s32 64, 64
          %360 = vsyncadd [#allocation18], %s359
          %s362 = sshll.u32 [#allocation17], 4
          %s363 = int_to_ptr.vmem [resolvable:$true] %s362
          %365 = dma.hbm_to_vmem [thread:$0]  %s7, 64, %s363, [#allocation18]
        $region36: #{tpu_custom_call.1} parent=11 // pred_fallthru
          _
        // Predicated region
        $region37: #{tpu_custom_call.1} parent=11 // pred_check
          %p366 = pneg %p232
        $region38: #{tpu_custom_call.1} parent=11 // pred_check_branch
          %368 = sbr.rel (%p366) target = $region40
        $region39: #{tpu_custom_call.1} parent=11 // pred_region
          %s370 = ssub.s32 1024, 1024
          %371 = vsyncadd [#allocation18], %s370
          %s372 = sshll.u32 [#allocation19], 4
          %s373 = int_to_ptr.vmem [resolvable:$true] %s372
          %378 = dma.hbm_to_vmem [thread:$0]  %s8, 1024, %s373, [#allocation18], 64, 64, 4
        $region40: #{tpu_custom_call.1} parent=11 // pred_fallthru
          _
        // Predicated region
        $region41: #{tpu_custom_call.1} parent=11 // pred_check
          %p379 = pneg %p253
        $region42: #{tpu_custom_call.1} parent=11 // pred_check_branch
          %381 = sbr.rel (%p379) target = $region44
        $region43: #{tpu_custom_call.1} parent=11 // pred_region
          %s383 = ssub.s32 16, 16
          %384 = vsyncadd [#allocation21], %s383
          %s386 = sshll.u32 [#allocation20], 4
          %s387 = int_to_ptr.vmem [resolvable:$true] %s386
          %389 = dma.hbm_to_vmem [thread:$0]  %s9, 16, %s387, [#allocation21]
        $region44: #{tpu_custom_call.1} parent=11 // pred_fallthru
          _
      $region12: #{tpu_custom_call.1} parent=5 // pred_fallthru
        _
      %p390 = scmp.lt.s32.totalorder %s29, 2
      // Predicated region
      $region45: #{tpu_custom_call.1} parent=5 // pred_check
        %p391 = pneg %p390
      $region46: #{tpu_custom_call.1} parent=5 // pred_check_branch
        %393 = sbr.rel (%p391) target = $region48
      $region47: #{tpu_custom_call.1} parent=5 // pred_region
        // Predicated region
        $region49: #{tpu_custom_call.1} parent=47 // pred_check
          %p394 = pneg %p49
        $region50: #{tpu_custom_call.1} parent=47 // pred_check_branch
          %396 = sbr.rel (%p394) target = $region52
        $region51: #{tpu_custom_call.1} parent=47 // pred_region
          #allocation24 [shape = 'u32[6]{0}', space=smem, size = 0x18, scoped, tag = 'DMA stride descriptor']
          %s397 = sand.u32 %s39, 1
          %s398 = scalar_lea.sflag [#allocation6], %s397
          %s399 = sand.u32 %s39, 1
          %s400 = smul.addr %s399, 32
          %s401 = scalar_lea.vmem [#allocation5], %s400
          %s402 = smul.u32 4, %s29
          %s403 = ssub.s32 10, %s402
          %p404 = scmp.lt.s32.totalorder %s403, 4
          %s405 = scalar_select %p404, %s403, 4
          %s406 = smul.u32 128, %s405
          %s408 = ssub.s32 512, %s406
          %409 = vsyncadd %s398, %s408
          %p410 = scmp.ne.s32.totalorder 0, %s406
          %s411 = smul.addr %s402, 64
          %s412 = scalar_lea.hbm %s0, %s411
          %s413 = smul.u32 4, %s405
          %s414 = smul.u32 %s413, 2
          %s416 = sshll.u32 1, 14
          %s417 = sxor.u32 4294967295, %s416
          %s419 = sld [smem:[#allocation0]]
          %s420 = sadd.s32 2, %s419
          %s422 = sshll.u32 7, 26
          %s423 = sxor.u32 4294967295, %s422
          %s424 = sand.u32 0, %s423
          %s425 = sshll.u32 %s420, 26
          %s426 = sor.u32 %s424, %s425
          %s427 = sshll.u32 %s401, 4
          %s428 = int_to_ptr.vmem [resolvable:$true] %s427
          %s429 = sshll.u32 %s414, 4
          %434 = sst [smem:[#allocation24]] 640
          %s435 = scalar_lea.smem [#allocation24], 1
          %436 = sst [smem:[%s435]] 256
          %s437 = scalar_lea.smem [#allocation24], 2
          %438 = sst [smem:[%s437]] %s405
          %s439 = scalar_lea.smem [#allocation24], 3
          %440 = sst [smem:[%s439]] 64
          %s441 = scalar_lea.smem [#allocation24], 4
          %442 = sst [smem:[%s441]] 64
          %s443 = scalar_lea.smem [#allocation24], 5
          %444 = sst [smem:[%s443]] 4
          %446 = dma.general (%p410), %s412, %s429, %s428, %s398, [#allocation23], [#allocation24], %s426, 0
        $region52: #{tpu_custom_call.1} parent=47 // pred_fallthru
          _
        // Predicated region
        $region53: #{tpu_custom_call.1} parent=47 // pred_check
          %p447 = pneg %p79
        $region54: #{tpu_custom_call.1} parent=47 // pred_check_branch
          %449 = sbr.rel (%p447) target = $region56
        $region55: #{tpu_custom_call.1} parent=47 // pred_region
          #allocation26 [shape = 'u32[6]{0}', space=smem, size = 0x18, scoped, tag = 'DMA stride descriptor']
          %s450 = sand.u32 %s29, 1
          %s451 = scalar_lea.sflag [#allocation9], %s450
          %s452 = sand.u32 %s69, 1
          %s453 = smul.addr %s452, 16
          %s454 = scalar_lea.vmem [#allocation8], %s453
          %s455 = sadd.s32 %s29, 1
          %s456 = smul.u32 %s455, 2
          %s457 = smul.u32 2, %s456
          %s459 = ssub.s32 256, 256
          %460 = vsyncadd %s451, %s459
          %s461 = smul.addr %s457, 64
          %s462 = scalar_lea.hbm %s1, %s461
          %s464 = sshll.u32 1, 14
          %s465 = sxor.u32 4294967295, %s464
          %s467 = sld [smem:[#allocation0]]
          %s468 = sadd.s32 2, %s467
          %s470 = sshll.u32 7, 26
          %s471 = sxor.u32 4294967295, %s470
          %s472 = sand.u32 0, %s471
          %s473 = sshll.u32 %s468, 26
          %s474 = sor.u32 %s472, %s473
          %s475 = sshll.u32 %s454, 4
          %s476 = int_to_ptr.vmem [resolvable:$true] %s475
          %482 = sst [smem:[#allocation26]] 640
          %s483 = scalar_lea.smem [#allocation26], 1
          %484 = sst [smem:[%s483]] 128
          %s485 = scalar_lea.smem [#allocation26], 2
          %486 = sst [smem:[%s485]] 2
          %s487 = scalar_lea.smem [#allocation26], 3
          %488 = sst [smem:[%s487]] 64
          %s489 = scalar_lea.smem [#allocation26], 4
          %490 = sst [smem:[%s489]] 64
          %s491 = scalar_lea.smem [#allocation26], 5
          %492 = sst [smem:[%s491]] 4
          %494 = dma.general %s462, 256, %s476, %s451, [#allocation25], [#allocation26], %s474, 0
        $region56: #{tpu_custom_call.1} parent=47 // pred_fallthru
          _
      $region48: #{tpu_custom_call.1} parent=5 // pred_fallthru
        _
      %p495 = scmp.le.s32.totalorder 1, %s29
      %p496 = scmp.lt.s32.totalorder %s29, 3
      %p497 = pnand %p495, %p496
      %p498 = pneg %p497
      // Predicated region
      $region57: #{tpu_custom_call.1} parent=5 // pred_check
        _
      $region58: #{tpu_custom_call.1} parent=5 // pred_check_branch
        %500 = sbr.rel (%p497) target = $region60
      $region59: #{tpu_custom_call.1} parent=5 // pred_region
        %s501 = ssub.s32 %s29, 1
        %s502 = sand.u32 %s42, 1
        %s503 = scalar_lea.sflag [#allocation6], %s502
        %s504 = sand.u32 %s42, 1
        %s505 = smul.addr %s504, 32
        %s506 = scalar_lea.vmem [#allocation5], %s505
        // Predicated region
        $region61: #{tpu_custom_call.1} parent=59 // pred_check
          %p507 = pneg %p55
        $region62: #{tpu_custom_call.1} parent=59 // pred_check_branch
          %509 = sbr.rel (%p507) target = $region64
        $region63: #{tpu_custom_call.1} parent=59 // pred_region
          %510 = dma.done %s503, 512
        $region64: #{tpu_custom_call.1} parent=59 // pred_fallthru
          _
        %s511 = sand.u32 %s34, 1
        %s512 = scalar_lea.sflag [#allocation9], %s511
        %s513 = sand.u32 %s72, 1
        %s514 = smul.addr %s513, 16
        %s515 = scalar_lea.vmem [#allocation8], %s514
        // Predicated region
        $region65: #{tpu_custom_call.1} parent=59 // pred_check
          %p516 = pneg %p85
        $region66: #{tpu_custom_call.1} parent=59 // pred_check_branch
          %518 = sbr.rel (%p516) target = $region68
        $region67: #{tpu_custom_call.1} parent=59 // pred_region
          %519 = dma.done %s512, 256
        $region68: #{tpu_custom_call.1} parent=59 // pred_fallthru
          _
        // Predicated region
        $region69: #{tpu_custom_call.1} parent=59 // pred_check
          %p520 = pneg %p106
        $region70: #{tpu_custom_call.1} parent=59 // pred_check_branch
          %522 = sbr.rel (%p520) target = $region72
        $region71: #{tpu_custom_call.1} parent=59 // pred_region
          %523 = dma.done [#allocation9], 3072
        $region72: #{tpu_custom_call.1} parent=59 // pred_fallthru
          _
        // Predicated region
        $region73: #{tpu_custom_call.1} parent=59 // pred_check
          %p524 = pneg %p127
        $region74: #{tpu_custom_call.1} parent=59 // pred_check_branch
          %526 = sbr.rel (%p524) target = $region76
        $region75: #{tpu_custom_call.1} parent=59 // pred_region
          %527 = dma.done [#allocation12], 16
        $region76: #{tpu_custom_call.1} parent=59 // pred_fallthru
          _
        // Predicated region
        $region77: #{tpu_custom_call.1} parent=59 // pred_check
          %p528 = pneg %p148
        $region78: #{tpu_custom_call.1} parent=59 // pred_check_branch
          %530 = sbr.rel (%p528) target = $region80
        $region79: #{tpu_custom_call.1} parent=59 // pred_region
          %531 = dma.done [#allocation12], 16
        $region80: #{tpu_custom_call.1} parent=59 // pred_fallthru
          _
        // Predicated region
        $region81: #{tpu_custom_call.1} parent=59 // pred_check
          %p532 = pneg %p169
        $region82: #{tpu_custom_call.1} parent=59 // pred_check_branch
          %534 = sbr.rel (%p532) target = $region84
        $region83: #{tpu_custom_call.1} parent=59 // pred_region
          %535 = dma.done [#allocation15], 4096
        $region84: #{tpu_custom_call.1} parent=59 // pred_fallthru
          _
        // Predicated region
        $region85: #{tpu_custom_call.1} parent=59 // pred_check
          %p536 = pneg %p190
        $region86: #{tpu_custom_call.1} parent=59 // pred_check_branch
          %538 = sbr.rel (%p536) target = $region88
        $region87: #{tpu_custom_call.1} parent=59 // pred_region
          %539 = dma.done [#allocation15], 4096
        $region88: #{tpu_custom_call.1} parent=59 // pred_fallthru
          _
        // Predicated region
        $region89: #{tpu_custom_call.1} parent=59 // pred_check
          %p540 = pneg %p211
        $region90: #{tpu_custom_call.1} parent=59 // pred_check_branch
          %542 = sbr.rel (%p540) target = $region92
        $region91: #{tpu_custom_call.1} parent=59 // pred_region
          %543 = dma.done [#allocation18], 64
        $region92: #{tpu_custom_call.1} parent=59 // pred_fallthru
          _
        // Predicated region
        $region93: #{tpu_custom_call.1} parent=59 // pred_check
          %p544 = pneg %p232
        $region94: #{tpu_custom_call.1} parent=59 // pred_check_branch
          %546 = sbr.rel (%p544) target = $region96
        $region95: #{tpu_custom_call.1} parent=59 // pred_region
          %547 = dma.done [#allocation18], 1024
        $region96: #{tpu_custom_call.1} parent=59 // pred_fallthru
          _
        // Predicated region
        $region97: #{tpu_custom_call.1} parent=59 // pred_check
          %p548 = pneg %p253
        $region98: #{tpu_custom_call.1} parent=59 // pred_check_branch
          %550 = sbr.rel (%p548) target = $region100
        $region99: #{tpu_custom_call.1} parent=59 // pred_region
          %551 = dma.done [#allocation21], 16
        $region100: #{tpu_custom_call.1} parent=59 // pred_fallthru
          _
        %s552 = sand.u32 %s42, 1
        %s553 = scalar_lea.sflag [#allocation6], %s552
        %s554 = sand.u32 %s42, 1
        %s555 = smul.addr %s554, 32
        %s556 = scalar_lea.vmem [#allocation5], %s555
        %p557 = pneg %p55
        %p558 = pneg %p52
        %s559 = sand.u32 %s34, 1
        %s560 = scalar_lea.sflag [#allocation9], %s559
        %s561 = sand.u32 %s72, 1
        %s562 = smul.addr %s561, 16
        %s563 = scalar_lea.vmem [#allocation8], %s562
        %p564 = pneg %p85
        %p565 = pneg %p82
        %p566 = pneg %p106
        %p567 = pneg %p103
        %p568 = pneg %p127
        %p569 = pneg %p124
        %p570 = pneg %p148
        %p571 = pneg %p145
        %p572 = pneg %p169
        %p573 = pneg %p166
        %p574 = pneg %p190
        %p575 = pneg %p187
        %p576 = pneg %p211
        %p577 = pneg %p208
        %p578 = pneg %p232
        %p579 = pneg %p229
        %p580 = pneg %p253
        %p581 = pneg %p250
        %p582 = pneg %p279
        %p583 = pneg %p276
        %s584 = sand.u32 %s266, 1
        %s585 = scalar_lea.sflag [#allocation7], %s584
        %s586 = sand.u32 %s266, 1
        %s587 = smul.addr %s586, 2
        %s588 = scalar_lea.vmem [#allocation22], %s587
        %s589 = smul.u32 4, %s34
        %s590 = ssub.s32 10, %s589
        %p591 = scmp.lt.s32.totalorder %s590, 4
        %s592 = scalar_select %p591, %s590, 4
        %s593 = smul.u32 128, %s592
        %s594 = sadd.s32 %s34, 1
        %s595 = smul.u32 %s594, 2
        %s596 = smul.u32 2, %s595
        %v598 = vld [vmem:[%s506] sm:$0xf]
        %v599 = vld [vmem:[%s506 + $0x4] sm:$0xf]
        %v600 = vld [vmem:[%s506 + $0x8] sm:$0xf]
        %v601 = vld [vmem:[%s506 + $0xc] sm:$0xf]
        %v602 = vld [vmem:[%s506 + $0x10] sm:$0xf]
        %v603 = vld [vmem:[%s506 + $0x14] sm:$0xf]
        %v604 = vld [vmem:[%s506 + $0x18] sm:$0xf]
        %v605 = vld [vmem:[%s506 + $0x1c] sm:$0xf]
        %v614 = vunpack.c.l.b16 %v598
        %v615 = vunpack.c.l.b16 %v599
        %v616 = vunpack.c.l.b16 %v600
        %v617 = vunpack.c.l.b16 %v601
        %v618 = vunpack.c.l.b16 %v602
        %v619 = vunpack.c.l.b16 %v603
        %v620 = vunpack.c.l.b16 %v604
        %v621 = vunpack.c.l.b16 %v605
        %v622 = vpack.c.b16 %v615, %v614
        %v623 = vpack.c.b16 %v617, %v616
        %v624 = vpack.c.b16 %v619, %v618
        %v625 = vpack.c.b16 %v621, %v620
        %630 = vst [vmem:[#allocation2] sm:$0xff] %v622
        %631 = vst [vmem:[#allocation2 + $0x8] sm:$0xff] %v623
        %632 = vst [vmem:[#allocation2 + $0x18] sm:$0xff] %v624
        %633 = vst [vmem:[#allocation2 + $0x20] sm:$0xff] %v625
        %v634 = vld [vmem:[%s515] sm:$0xf]
        %v635 = vld [vmem:[%s515 + $0x4] sm:$0xf]
        %v636 = vld [vmem:[%s515 + $0x8] sm:$0xf]
        %v637 = vld [vmem:[%s515 + $0xc] sm:$0xf]
        %v642 = vunpack.c.l.b16 %v634
        %v643 = vunpack.c.l.b16 %v635
        %v644 = vunpack.c.l.b16 %v636
        %v645 = vunpack.c.l.b16 %v637
        %v646 = vpack.c.b16 %v643, %v642
        %v647 = vpack.c.b16 %v645, %v644
        %650 = vst [vmem:[#allocation2 + $0x10] sm:$0xff] %v646
        %651 = vst [vmem:[#allocation2 + $0x28] sm:$0xff] %v647
        %v652 = vld [vmem:[#allocation2] sm:$0xff]
        %v653 = vld [vmem:[#allocation2 + $0x8] sm:$0xff]
        %v654 = vld [vmem:[#allocation2 + $0x18] sm:$0xff]
        %v655 = vld [vmem:[#allocation2 + $0x20] sm:$0xff]
        %v656 = vld [vmem:[#allocation10] sm:$0xf]
        %v657 = vld [vmem:[#allocation10 + $0x4] sm:$0xf]
        %v658 = vld [vmem:[#allocation10 + $0x8] sm:$0xf]
        %v659 = vld [vmem:[#allocation10 + $0xc] sm:$0xf]
        %v660 = vld [vmem:[#allocation10 + $0x10] sm:$0xf]
        %v661 = vld [vmem:[#allocation10 + $0x14] sm:$0xf]
        %v662 = vld [vmem:[#allocation10 + $0x18] sm:$0xf]
        %v663 = vld [vmem:[#allocation10 + $0x1c] sm:$0xf]
        %v664 = vld [vmem:[#allocation10 + $0x20] sm:$0xf]
        %v665 = vld [vmem:[#allocation10 + $0x24] sm:$0xf]
        %v666 = vld [vmem:[#allocation10 + $0x28] sm:$0xf]
        %v667 = vld [vmem:[#allocation10 + $0x2c] sm:$0xf]
        %v668 = vld [vmem:[#allocation10 + $0x30] sm:$0xf]
        %v669 = vld [vmem:[#allocation10 + $0x34] sm:$0xf]
        %v670 = vld [vmem:[#allocation10 + $0x38] sm:$0xf]
        %v671 = vld [vmem:[#allocation10 + $0x3c] sm:$0xf]
        %v672 = vld [vmem:[#allocation2] sm:$0xff]
        %v673 = vld [vmem:[#allocation2 + $0x8] sm:$0xff]
        %v674 = vld [vmem:[#allocation2 + $0x10] sm:$0x1]
        %v675 = vld [vmem:[#allocation2 + $0x18] sm:$0xff]
        %v676 = vld [vmem:[#allocation2 + $0x20] sm:$0xff]
        %v677 = vld [vmem:[#allocation2 + $0x28] sm:$0x1]
        %vm678 = vsmask.f32 7424
        %v680 = vshrl.u32 %v672, 16
        %v682 = vshll.u32 %v672, 16
        %v684 = vrot.slane %v682, 1
        %v685 = vor.u32 %v680, %v684
        %v687 = vshll.u32 %v673, 16
        %v689 = vrot.slane %v687, 1
        %v690 = vsel %vm678, %v685, %v689
        %v691 = vshrl.u32 %v673, 16
        %v693 = vor.u32 %v691, %v689
        %v695 = vshll.u32 %v674, 16
        %v697 = vrot.slane %v695, 1
        %v698 = vsel %vm678, %v693, %v697
        %v700 = vshrl.u32 %v675, 16
        %v702 = vshll.u32 %v675, 16
        %v704 = vrot.slane %v702, 1
        %v705 = vor.u32 %v700, %v704
        %v707 = vshll.u32 %v676, 16
        %v709 = vrot.slane %v707, 1
        %v710 = vsel %vm678, %v705, %v709
        %v711 = vshrl.u32 %v676, 16
        %v713 = vor.u32 %v711, %v709
        %v715 = vshll.u32 %v677, 16
        %v717 = vrot.slane %v715, 1
        %v718 = vsel %vm678, %v713, %v717
        %s723 = scalar_lea.vmem [#allocation10], 64
        %v724 = vld [vmem:[%s723] sm:$0xf]
        %v725 = vld [vmem:[%s723 + $0x4] sm:$0xf]
        %v726 = vld [vmem:[%s723 + $0x8] sm:$0xf]
        %v727 = vld [vmem:[%s723 + $0xc] sm:$0xf]
        %v728 = vld [vmem:[%s723 + $0x10] sm:$0xf]
        %v729 = vld [vmem:[%s723 + $0x14] sm:$0xf]
        %v730 = vld [vmem:[%s723 + $0x18] sm:$0xf]
        %v731 = vld [vmem:[%s723 + $0x1c] sm:$0xf]
        %v732 = vld [vmem:[%s723 + $0x20] sm:$0xf]
        %v733 = vld [vmem:[%s723 + $0x24] sm:$0xf]
        %v734 = vld [vmem:[%s723 + $0x28] sm:$0xf]
        %v735 = vld [vmem:[%s723 + $0x2c] sm:$0xf]
        %v736 = vld [vmem:[%s723 + $0x30] sm:$0xf]
        %v737 = vld [vmem:[%s723 + $0x34] sm:$0xf]
        %v738 = vld [vmem:[%s723 + $0x38] sm:$0xf]
        %v739 = vld [vmem:[%s723 + $0x3c] sm:$0xf]
        %v756 = vunpack.c.l.b16 %v724
        %v757 = vunpack.c.l.b16 %v725
        %v758 = vunpack.c.l.b16 %v726
        %v759 = vunpack.c.l.b16 %v727
        %v760 = vunpack.c.l.b16 %v728
        %v761 = vunpack.c.l.b16 %v729
        %v762 = vunpack.c.l.b16 %v730
        %v763 = vunpack.c.l.b16 %v731
        %v764 = vunpack.c.l.b16 %v732
        %v765 = vunpack.c.l.b16 %v733
        %v766 = vunpack.c.l.b16 %v734
        %v767 = vunpack.c.l.b16 %v735
        %v768 = vunpack.c.l.b16 %v736
        %v769 = vunpack.c.l.b16 %v737
        %v770 = vunpack.c.l.b16 %v738
        %v771 = vunpack.c.l.b16 %v739
        %v772 = vpack.c.b16 %v757, %v756
        %v773 = vpack.c.b16 %v759, %v758
        %v774 = vpack.c.b16 %v761, %v760
        %v775 = vpack.c.b16 %v763, %v762
        %v776 = vpack.c.b16 %v765, %v764
        %v777 = vpack.c.b16 %v767, %v766
        %v778 = vpack.c.b16 %v769, %v768
        %v779 = vpack.c.b16 %v771, %v770
        %788 = vmatprep.subr.bf16.mxu0 0
        %789 = vmatpush1.bf16.msra.mxu0 %v772
        %790 = vmatprep.subr.bf16.mxu0 0
        %791 = vmatpush1.bf16.msra.mxu0 %v773
        %792 = vmatprep.subr.bf16.mxu0 0
        %793 = vmatpush1.bf16.msra.mxu0 %v774
        %794 = vmatprep.subr.bf16.mxu0 0
        %795 = vmatpush1.bf16.msra.mxu0 %v775
        %796 = vmatprep.subr.bf16.mxu0 0
        %797 = vmatpush1.bf16.msra.mxu0 %v776
        %798 = vmatprep.subr.bf16.mxu0 0
        %799 = vmatpush1.bf16.msra.mxu0 %v777
        %800 = vmatprep.subr.bf16.mxu0 0
        %801 = vmatpush1.bf16.msra.mxu0 %v778
        %802 = vmatprep.subr.bf16.mxu0 0
        %803 = vmatpush1.bf16.msra.mxu0 %v779
        %804 = vmatprep.subr.bf16.mxu0 0
        %805 = vmatpush1.bf16.msra.mxu0 0
        %806 = vmatprep.subr.bf16.mxu0 0
        %807 = vmatpush1.bf16.msra.mxu0 0
        %808 = vmatprep.subr.bf16.mxu0 0
        %809 = vmatpush1.bf16.msra.mxu0 0
        %810 = vmatprep.subr.bf16.mxu0 0
        %811 = vmatpush1.bf16.msra.mxu0 0
        %812 = vmatprep.subr.bf16.mxu0 0
        %813 = vmatpush1.bf16.msra.mxu0 0
        %814 = vmatprep.subr.bf16.mxu0 0
        %815 = vmatpush1.bf16.msra.mxu0 0
        %816 = vmatprep.subr.bf16.mxu0 0
        %817 = vmatpush1.bf16.msra.mxu0 0
        %818 = vmatprep.subr.bf16.mxu0 0
        %819 = vmatpush1.bf16.msra.mxu0 0
        %820 = vmatprep.mubr.bf16.mxu0 0
        %821 = vmatmul.mubr.bf16.gmra.mrb[0].mxu0 %v690
        %v822 = vpop.f32.mrb[0].mxu0
        %v823 = vadd.f32 0.0, %v822
        %v824 = vpop.f32.mrb[0].mxu0
        %v825 = vpop.f32.mrb[0].mxu0
        %v826 = vadd.f32 0.0, %v825
        %v827 = vpop.f32.mrb[0].mxu0
        %828 = vmatprep.mubr.bf16.mxu0 0
        %829 = vmatmul.mubr.bf16.gmra.mrb[0].mxu0 %v698
        %v830 = vpop.f32.mrb[0].mxu0
        %v831 = vadd.f32 0.0, %v830
        %v832 = vpop.f32.mrb[0].mxu0
        %v833 = vpop.f32.mrb[0].mxu0
        %v834 = vadd.f32 0.0, %v833
        %v835 = vpop.f32.mrb[0].mxu0
        %836 = vmatprep.mubr.bf16.mxu0 0
        %837 = vmatmul.mubr.bf16.gmra.mrb[0].mxu0 %v710
        %v838 = vpop.f32.mrb[0].mxu0
        %v839 = vadd.f32 0.0, %v838
        %v840 = vpop.f32.mrb[0].mxu0
        %v841 = vpop.f32.mrb[0].mxu0
        %v842 = vadd.f32 0.0, %v841
        %v843 = vpop.f32.mrb[0].mxu0
        %844 = vmatprep.mubr.bf16.mxu0 0
        %845 = vmatmul.mubr.bf16.gmra.mrb[0].mxu0 %v718
        %v846 = vpop.f32.mrb[0].mxu0
        %v847 = vadd.f32 0.0, %v846
        %v848 = vpop.f32.mrb[0].mxu0
        %v849 = vpop.f32.mrb[0].mxu0
        %v850 = vadd.f32 0.0, %v849
        %v851 = vpop.f32.mrb[0].mxu0
        %852 = vdwg.mxu0
        %v869 = vunpack.c.l.b16 %v656
        %v870 = vunpack.c.l.b16 %v657
        %v871 = vunpack.c.l.b16 %v658
        %v872 = vunpack.c.l.b16 %v659
        %v873 = vunpack.c.l.b16 %v660
        %v874 = vunpack.c.l.b16 %v661
        %v875 = vunpack.c.l.b16 %v662
        %v876 = vunpack.c.l.b16 %v663
        %v877 = vunpack.c.l.b16 %v664
        %v878 = vunpack.c.l.b16 %v665
        %v879 = vunpack.c.l.b16 %v666
        %v880 = vunpack.c.l.b16 %v667
        %v881 = vunpack.c.l.b16 %v668
        %v882 = vunpack.c.l.b16 %v669
        %v883 = vunpack.c.l.b16 %v670
        %v884 = vunpack.c.l.b16 %v671
        %v885 = vpack.c.b16 %v870, %v869
        %v886 = vpack.c.b16 %v872, %v871
        %v887 = vpack.c.b16 %v874, %v873
        %v888 = vpack.c.b16 %v876, %v875
        %v889 = vpack.c.b16 %v878, %v877
        %v890 = vpack.c.b16 %v880, %v879
        %v891 = vpack.c.b16 %v882, %v881
        %v892 = vpack.c.b16 %v884, %v883
        %901 = vmatprep.subr.bf16.mxu0 0
        %902 = vmatpush1.bf16.msra.mxu0 %v885
        %903 = vmatprep.subr.bf16.mxu0 0
        %904 = vmatpush1.bf16.msra.mxu0 %v886
        %905 = vmatprep.subr.bf16.mxu0 0
        %906 = vmatpush1.bf16.msra.mxu0 %v887
        %907 = vmatprep.subr.bf16.mxu0 0
        %908 = vmatpush1.bf16.msra.mxu0 %v888
        %909 = vmatprep.subr.bf16.mxu0 0
        %910 = vmatpush1.bf16.msra.mxu0 %v889
        %911 = vmatprep.subr.bf16.mxu0 0
        %912 = vmatpush1.bf16.msra.mxu0 %v890
        %913 = vmatprep.subr.bf16.mxu0 0
        %914 = vmatpush1.bf16.msra.mxu0 %v891
        %915 = vmatprep.subr.bf16.mxu0 0
        %916 = vmatpush1.bf16.msra.mxu0 %v892
        %917 = vmatprep.subr.bf16.mxu0 0
        %918 = vmatpush1.bf16.msra.mxu0 0
        %919 = vmatprep.subr.bf16.mxu0 0
        %920 = vmatpush1.bf16.msra.mxu0 0
        %921 = vmatprep.subr.bf16.mxu0 0
        %922 = vmatpush1.bf16.msra.mxu0 0
        %923 = vmatprep.subr.bf16.mxu0 0
        %924 = vmatpush1.bf16.msra.mxu0 0
        %925 = vmatprep.subr.bf16.mxu0 0
        %926 = vmatpush1.bf16.msra.mxu0 0
        %927 = vmatprep.subr.bf16.mxu0 0
        %928 = vmatpush1.bf16.msra.mxu0 0
        %929 = vmatprep.subr.bf16.mxu0 0
        %930 = vmatpush1.bf16.msra.mxu0 0
        %931 = vmatprep.subr.bf16.mxu0 0
        %932 = vmatpush1.bf16.msra.mxu0 0
        %933 = vmatprep.mubr.bf16.mxu0 0
        %934 = vmatmul.mubr.bf16.gmra.mrb[0].mxu0 %v652
        %v935 = vpop.f32.mrb[0].mxu0
        %v936 = vadd.f32 %v823, %v935
        %v937 = vpop.f32.mrb[0].mxu0
        %v938 = vpop.f32.mrb[0].mxu0
        %v939 = vadd.f32 %v826, %v938
        %v940 = vpop.f32.mrb[0].mxu0
        %941 = vmatprep.mubr.bf16.mxu0 0
        %942 = vmatmul.mubr.bf16.gmra.mrb[0].mxu0 %v653
        %v943 = vpop.f32.mrb[0].mxu0
        %v944 = vadd.f32 %v831, %v943
        %v945 = vpop.f32.mrb[0].mxu0
        %v946 = vpop.f32.mrb[0].mxu0
        %v947 = vadd.f32 %v834, %v946
        %v948 = vpop.f32.mrb[0].mxu0
        %949 = vmatprep.mubr.bf16.mxu0 0
        %950 = vmatmul.mubr.bf16.gmra.mrb[0].mxu0 %v654
        %v951 = vpop.f32.mrb[0].mxu0
        %v952 = vadd.f32 %v839, %v951
        %v953 = vpop.f32.mrb[0].mxu0
        %v954 = vpop.f32.mrb[0].mxu0
        %v955 = vadd.f32 %v842, %v954
        %v956 = vpop.f32.mrb[0].mxu0
        %957 = vmatprep.mubr.bf16.mxu0 0
        %958 = vmatmul.mubr.bf16.gmra.mrb[0].mxu0 %v655
        %v959 = vpop.f32.mrb[0].mxu0
        %v960 = vadd.f32 %v847, %v959
        %v961 = vpop.f32.mrb[0].mxu0
        %v962 = vpop.f32.mrb[0].mxu0
        %v963 = vadd.f32 %v850, %v962
        %v964 = vpop.f32.mrb[0].mxu0
        %965 = vdwg.mxu0
        %v966 = vld [vmem:[#allocation2] sm:$0xfe]
        %v967 = vld [vmem:[#allocation2 + $0x18] sm:$0xfe]
        %vm974 = vcmask 1046528
        %v975 = vrot.slane %v966, 1
        %v976 = vrot.slane %v673, 1
        %v977 = vsel %vm974, %v975, %v976
        %v978 = vrot.slane %v674, 1
        %v979 = vsel %vm974, %v976, %v978
        %v980 = vrot.slane %v967, 1
        %v981 = vrot.slane %v676, 1
        %v982 = vsel %vm974, %v980, %v981
        %v983 = vrot.slane %v677, 1
        %v984 = vsel %vm974, %v981, %v983
        %s989 = scalar_lea.vmem [#allocation10], 128
        %v990 = vld [vmem:[%s989] sm:$0xf]
        %v991 = vld [vmem:[%s989 + $0x4] sm:$0xf]
        %v992 = vld [vmem:[%s989 + $0x8] sm:$0xf]
        %v993 = vld [vmem:[%s989 + $0xc] sm:$0xf]
        %v994 = vld [vmem:[%s989 + $0x10] sm:$0xf]
        %v995 = vld [vmem:[%s989 + $0x14] sm:$0xf]
        %v996 = vld [vmem:[%s989 + $0x18] sm:$0xf]
        %v997 = vld [vmem:[%s989 + $0x1c] sm:$0xf]
        %v998 = vld [vmem:[%s989 + $0x20] sm:$0xf]
        %v999 = vld [vmem:[%s989 + $0x24] sm:$0xf]
        %v1000 = vld [vmem:[%s989 + $0x28] sm:$0xf]
        %v1001 = vld [vmem:[%s989 + $0x2c] sm:$0xf]
        %v1002 = vld [vmem:[%s989 + $0x30] sm:$0xf]
        %v1003 = vld [vmem:[%s989 + $0x34] sm:$0xf]
        %v1004 = vld [vmem:[%s989 + $0x38] sm:$0xf]
        %v1005 = vld [vmem:[%s989 + $0x3c] sm:$0xf]
        %v1022 = vunpack.c.l.b16 %v990
        %v1023 = vunpack.c.l.b16 %v991
        %v1024 = vunpack.c.l.b16 %v992
        %v1025 = vunpack.c.l.b16 %v993
        %v1026 = vunpack.c.l.b16 %v994
        %v1027 = vunpack.c.l.b16 %v995
        %v1028 = vunpack.c.l.b16 %v996
        %v1029 = vunpack.c.l.b16 %v997
        %v1030 = vunpack.c.l.b16 %v998
        %v1031 = vunpack.c.l.b16 %v999
        %v1032 = vunpack.c.l.b16 %v1000
        %v1033 = vunpack.c.l.b16 %v1001
        %v1034 = vunpack.c.l.b16 %v1002
        %v1035 = vunpack.c.l.b16 %v1003
        %v1036 = vunpack.c.l.b16 %v1004
        %v1037 = vunpack.c.l.b16 %v1005
        %v1038 = vpack.c.b16 %v1023, %v1022
        %v1039 = vpack.c.b16 %v1025, %v1024
        %v1040 = vpack.c.b16 %v1027, %v1026
        %v1041 = vpack.c.b16 %v1029, %v1028
        %v1042 = vpack.c.b16 %v1031, %v1030
        %v1043 = vpack.c.b16 %v1033, %v1032
        %v1044 = vpack.c.b16 %v1035, %v1034
        %v1045 = vpack.c.b16 %v1037, %v1036
        %1054 = vmatprep.subr.bf16.mxu0 0
        %1055 = vmatpush1.bf16.msra.mxu0 %v1038
        %1056 = vmatprep.subr.bf16.mxu0 0
        %1057 = vmatpush1.bf16.msra.mxu0 %v1039
        %1058 = vmatprep.subr.bf16.mxu0 0
        %1059 = vmatpush1.bf16.msra.mxu0 %v1040
        %1060 = vmatprep.subr.bf16.mxu0 0
        %1061 = vmatpush1.bf16.msra.mxu0 %v1041
        %1062 = vmatprep.subr.bf16.mxu0 0
        %1063 = vmatpush1.bf16.msra.mxu0 %v1042
        %1064 = vmatprep.subr.bf16.mxu0 0
        %1065 = vmatpush1.bf16.msra.mxu0 %v1043
        %1066 = vmatprep.subr.bf16.mxu0 0
        %1067 = vmatpush1.bf16.msra.mxu0 %v1044
        %1068 = vmatprep.subr.bf16.mxu0 0
        %1069 = vmatpush1.bf16.msra.mxu0 %v1045
        %1070 = vmatprep.subr.bf16.mxu0 0
        %1071 = vmatpush1.bf16.msra.mxu0 0
        %1072 = vmatprep.subr.bf16.mxu0 0
        %1073 = vmatpush1.bf16.msra.mxu0 0
        %1074 = vmatprep.subr.bf16.mxu0 0
        %1075 = vmatpush1.bf16.msra.mxu0 0
        %1076 = vmatprep.subr.bf16.mxu0 0
        %1077 = vmatpush1.bf16.msra.mxu0 0
        %1078 = vmatprep.subr.bf16.mxu0 0
        %1079 = vmatpush1.bf16.msra.mxu0 0
        %1080 = vmatprep.subr.bf16.mxu0 0
        %1081 = vmatpush1.bf16.msra.mxu0 0
        %1082 = vmatprep.subr.bf16.mxu0 0
        %1083 = vmatpush1.bf16.msra.mxu0 0
        %1084 = vmatprep.subr.bf16.mxu0 0
        %1085 = vmatpush1.bf16.msra.mxu0 0
        %1086 = vmatprep.mubr.bf16.mxu0 0
        %1087 = vmatmul.mubr.bf16.gmra.mrb[0].mxu0 %v977
        %v1088 = vpop.f32.mrb[0].mxu0
        %v1089 = vadd.f32 0.0, %v1088
        %v1090 = vpop.f32.mrb[0].mxu0
        %v1091 = vpop.f32.mrb[0].mxu0
        %v1092 = vadd.f32 0.0, %v1091
        %v1093 = vpop.f32.mrb[0].mxu0
        %1094 = vmatprep.mubr.bf16.mxu0 0
        %1095 = vmatmul.mubr.bf16.gmra.mrb[0].mxu0 %v979
        %v1096 = vpop.f32.mrb[0].mxu0
        %v1097 = vadd.f32 0.0, %v1096
        %v1098 = vpop.f32.mrb[0].mxu0
        %v1099 = vpop.f32.mrb[0].mxu0
        %v1100 = vadd.f32 0.0, %v1099
        %v1101 = vpop.f32.mrb[0].mxu0
        %1102 = vmatprep.mubr.bf16.mxu0 0
        %1103 = vmatmul.mubr.bf16.gmra.mrb[0].mxu0 %v982
        %v1104 = vpop.f32.mrb[0].mxu0
        %v1105 = vadd.f32 0.0, %v1104
        %v1106 = vpop.f32.mrb[0].mxu0
        %v1107 = vpop.f32.mrb[0].mxu0
        %v1108 = vadd.f32 0.0, %v1107
        %v1109 = vpop.f32.mrb[0].mxu0
        %1110 = vmatprep.mubr.bf16.mxu0 0
        %1111 = vmatmul.mubr.bf16.gmra.mrb[0].mxu0 %v984
        %v1112 = vpop.f32.mrb[0].mxu0
        %v1113 = vadd.f32 0.0, %v1112
        %v1114 = vpop.f32.mrb[0].mxu0
        %v1115 = vpop.f32.mrb[0].mxu0
        %v1116 = vadd.f32 0.0, %v1115
        %v1117 = vpop.f32.mrb[0].mxu0
        %1118 = vdwg.mxu0
        %v1119 = vadd.f32 %v936, %v1089
        %v1120 = vadd.f32 %v939, %v1092
        %v1121 = vadd.f32 %v944, %v1097
        %v1122 = vadd.f32 %v947, %v1100
        %v1123 = vadd.f32 %v952, %v1105
        %v1124 = vadd.f32 %v955, %v1108
        %v1125 = vadd.f32 %v960, %v1113
        %v1126 = vadd.f32 %v963, %v1116
        %v1127 = vld [vmem:[#allocation11] sm:$0x1]
        %v1129 = vlaneseq
        %v1130 = vshrl.u32 %v1129, 7
        %v1131 = vsub.s32 0, %v1130
        %v1132 = vrot.slane %v1127, %v1131
        %v1134 = vmul.f32 %v1119, %v1132
        %v1135 = vmul.f32 %v1120, %v1132
        %v1136 = vmul.f32 %v1121, %v1132
        %v1137 = vmul.f32 %v1122, %v1132
        %v1138 = vmul.f32 %v1123, %v1132
        %v1139 = vmul.f32 %v1124, %v1132
        %v1140 = vmul.f32 %v1125, %v1132
        %v1141 = vmul.f32 %v1126, %v1132
        %v1142 = vld [vmem:[#allocation13] sm:$0x1]
        %v1144 = vlaneseq
        %v1145 = vshrl.u32 %v1144, 7
        %v1146 = vsub.s32 0, %v1145
        %v1147 = vrot.slane %v1142, %v1146
        %v1149 = vadd.f32 %v1134, %v1147
        %v1150 = vadd.f32 %v1135, %v1147
        %v1151 = vadd.f32 %v1136, %v1147
        %v1152 = vadd.f32 %v1137, %v1147
        %v1153 = vadd.f32 %v1138, %v1147
        %v1154 = vadd.f32 %v1139, %v1147
        %v1155 = vadd.f32 %v1140, %v1147
        %v1156 = vadd.f32 %v1141, %v1147
        %v1157 = vmax.f32 %v1149, 0.0
        %v1158 = vmax.f32 %v1150, 0.0
        %v1159 = vmax.f32 %v1151, 0.0
        %v1160 = vmax.f32 %v1152, 0.0
        %v1161 = vmax.f32 %v1153, 0.0
        %v1162 = vmax.f32 %v1154, 0.0
        %v1163 = vmax.f32 %v1155, 0.0
        %v1164 = vmax.f32 %v1156, 0.0
        %v1165 = vpack.c.bf16 %v1158, %v1157
        %v1166 = vpack.c.bf16 %v1160, %v1159
        %v1167 = vpack.c.bf16 %v1162, %v1161
        %v1168 = vpack.c.bf16 %v1164, %v1163
        %v1169 = vld [vmem:[#allocation14] sm:$0xff]
        %v1170 = vld [vmem:[#allocation14 + $0x8] sm:$0xff]
        %v1171 = vld [vmem:[#allocation14 + $0x10] sm:$0xff]
        %v1172 = vld [vmem:[#allocation14 + $0x18] sm:$0xff]
        %v1173 = vld [vmem:[#allocation14 + $0x20] sm:$0xff]
        %v1174 = vld [vmem:[#allocation14 + $0x28] sm:$0xff]
        %v1175 = vld [vmem:[#allocation14 + $0x30] sm:$0xff]
        %v1176 = vld [vmem:[#allocation14 + $0x38] sm:$0xff]
        %v1177 = vld [vmem:[#allocation14 + $0x40] sm:$0xff]
        %v1178 = vld [vmem:[#allocation14 + $0x48] sm:$0xff]
        %v1179 = vld [vmem:[#allocation14 + $0x50] sm:$0xff]
        %v1180 = vld [vmem:[#allocation14 + $0x58] sm:$0xff]
        %v1181 = vld [vmem:[#allocation14 + $0x60] sm:$0xff]
        %v1182 = vld [vmem:[#allocation14 + $0x68] sm:$0xff]
        %v1183 = vld [vmem:[#allocation14 + $0x70] sm:$0xff]
        %v1184 = vld [vmem:[#allocation14 + $0x78] sm:$0xff]
        %v1185 = vld [vmem:[#allocation14 + $0x80] sm:$0xff]
        %v1186 = vld [vmem:[#allocation14 + $0x88] sm:$0xff]
        %v1187 = vld [vmem:[#allocation14 + $0x90] sm:$0xff]
        %v1188 = vld [vmem:[#allocation14 + $0x98] sm:$0xff]
        %v1189 = vld [vmem:[#allocation14 + $0xa0] sm:$0xff]
        %v1190 = vld [vmem:[#allocation14 + $0xa8] sm:$0xff]
        %v1191 = vld [vmem:[#allocation14 + $0xb0] sm:$0xff]
        %v1192 = vld [vmem:[#allocation14 + $0xb8] sm:$0xff]
        %v1193 = vld [vmem:[#allocation14 + $0xc0] sm:$0xff]
        %v1194 = vld [vmem:[#allocation14 + $0xc8] sm:$0xff]
        %v1195 = vld [vmem:[#allocation14 + $0xd0] sm:$0xff]
        %v1196 = vld [vmem:[#allocation14 + $0xd8] sm:$0xff]
        %v1197 = vld [vmem:[#allocation14 + $0xe0] sm:$0xff]
        %v1198 = vld [vmem:[#allocation14 + $0xe8] sm:$0xff]
        %v1199 = vld [vmem:[#allocation14 + $0xf0] sm:$0xff]
        %v1200 = vld [vmem:[#allocation14 + $0xf8] sm:$0xff]
        %v1201 = vld [vmem:[#allocation17] sm:$0xf]
        %v1203 = vlaneseq
        %v1204 = vshrl.u32 %v1203, 7
        %v1205 = vsub.s32 0, %v1204
        %v1206 = vrot.slane %v1201, %v1205
        %v1207 = vlaneseq
        %v1208 = vshrl.u32 %v1207, 7
        %v1209 = vsub.s32 1, %v1208
        %v1210 = vrot.slane %v1201, %v1209
        %v1211 = vlaneseq
        %v1212 = vshrl.u32 %v1211, 7
        %v1213 = vsub.s32 2, %v1212
        %v1214 = vrot.slane %v1201, %v1213
        %v1215 = vlaneseq
        %v1216 = vshrl.u32 %v1215, 7
        %v1217 = vsub.s32 3, %v1216
        %v1218 = vrot.slane %v1201, %v1217
        %v1255 = vunpack.c.l.b16 %v1169
        %v1256 = vunpack.c.h.b16 %v1169
        %v1257 = vunpack.c.l.b16 %v1170
        %v1258 = vunpack.c.h.b16 %v1170
        %v1259 = vunpack.c.l.b16 %v1171
        %v1260 = vunpack.c.h.b16 %v1171
        %v1261 = vunpack.c.l.b16 %v1172
        %v1262 = vunpack.c.h.b16 %v1172
        %v1263 = vunpack.c.l.b16 %v1173
        %v1264 = vunpack.c.h.b16 %v1173
        %v1265 = vunpack.c.l.b16 %v1174
        %v1266 = vunpack.c.h.b16 %v1174
        %v1267 = vunpack.c.l.b16 %v1175
        %v1268 = vunpack.c.h.b16 %v1175
        %v1269 = vunpack.c.l.b16 %v1176
        %v1270 = vunpack.c.h.b16 %v1176
        %v1271 = vunpack.c.l.b16 %v1177
        %v1272 = vunpack.c.h.b16 %v1177
        %v1273 = vunpack.c.l.b16 %v1178
        %v1274 = vunpack.c.h.b16 %v1178
        %v1275 = vunpack.c.l.b16 %v1179
        %v1276 = vunpack.c.h.b16 %v1179
        %v1277 = vunpack.c.l.b16 %v1180
        %v1278 = vunpack.c.h.b16 %v1180
        %v1279 = vunpack.c.l.b16 %v1181
        %v1280 = vunpack.c.h.b16 %v1181
        %v1281 = vunpack.c.l.b16 %v1182
        %v1282 = vunpack.c.h.b16 %v1182
        %v1283 = vunpack.c.l.b16 %v1183
        %v1284 = vunpack.c.h.b16 %v1183
        %v1285 = vunpack.c.l.b16 %v1184
        %v1286 = vunpack.c.h.b16 %v1184
        %v1287 = vunpack.c.l.b16 %v1185
        %v1288 = vunpack.c.h.b16 %v1185
        %v1289 = vunpack.c.l.b16 %v1186
        %v1290 = vunpack.c.h.b16 %v1186
        %v1291 = vunpack.c.l.b16 %v1187
        %v1292 = vunpack.c.h.b16 %v1187
        %v1293 = vunpack.c.l.b16 %v1188
        %v1294 = vunpack.c.h.b16 %v1188
        %v1295 = vunpack.c.l.b16 %v1189
        %v1296 = vunpack.c.h.b16 %v1189
        %v1297 = vunpack.c.l.b16 %v1190
        %v1298 = vunpack.c.h.b16 %v1190
        %v1299 = vunpack.c.l.b16 %v1191
        %v1300 = vunpack.c.h.b16 %v1191
        %v1301 = vunpack.c.l.b16 %v1192
        %v1302 = vunpack.c.h.b16 %v1192
        %v1303 = vunpack.c.l.b16 %v1193
        %v1304 = vunpack.c.h.b16 %v1193
        %v1305 = vunpack.c.l.b16 %v1194
        %v1306 = vunpack.c.h.b16 %v1194
        %v1307 = vunpack.c.l.b16 %v1195
        %v1308 = vunpack.c.h.b16 %v1195
        %v1309 = vunpack.c.l.b16 %v1196
        %v1310 = vunpack.c.h.b16 %v1196
        %v1311 = vunpack.c.l.b16 %v1197
        %v1312 = vunpack.c.h.b16 %v1197
        %v1313 = vunpack.c.l.b16 %v1198
        %v1314 = vunpack.c.h.b16 %v1198
        %v1315 = vunpack.c.l.b16 %v1199
        %v1316 = vunpack.c.h.b16 %v1199
        %v1317 = vunpack.c.l.b16 %v1200
        %v1318 = vunpack.c.h.b16 %v1200
        %v1319 = vpack.c.b16 %v1259, %v1255
        %v1320 = vpack.c.b16 %v1260, %v1256
        %v1321 = vpack.c.b16 %v1261, %v1257
        %v1322 = vpack.c.b16 %v1262, %v1258
        %v1323 = vpack.c.b16 %v1267, %v1263
        %v1324 = vpack.c.b16 %v1268, %v1264
        %v1325 = vpack.c.b16 %v1269, %v1265
        %v1326 = vpack.c.b16 %v1270, %v1266
        %v1327 = vpack.c.b16 %v1275, %v1271
        %v1328 = vpack.c.b16 %v1276, %v1272
        %v1329 = vpack.c.b16 %v1277, %v1273
        %v1330 = vpack.c.b16 %v1278, %v1274
        %v1331 = vpack.c.b16 %v1283, %v1279
        %v1332 = vpack.c.b16 %v1284, %v1280
        %v1333 = vpack.c.b16 %v1285, %v1281
        %v1334 = vpack.c.b16 %v1286, %v1282
        %v1335 = vpack.c.b16 %v1291, %v1287
        %v1336 = vpack.c.b16 %v1292, %v1288
        %v1337 = vpack.c.b16 %v1293, %v1289
        %v1338 = vpack.c.b16 %v1294, %v1290
        %v1339 = vpack.c.b16 %v1299, %v1295
        %v1340 = vpack.c.b16 %v1300, %v1296
        %v1341 = vpack.c.b16 %v1301, %v1297
        %v1342 = vpack.c.b16 %v1302, %v1298
        %v1343 = vpack.c.b16 %v1307, %v1303
        %v1344 = vpack.c.b16 %v1308, %v1304
        %v1345 = vpack.c.b16 %v1309, %v1305
        %v1346 = vpack.c.b16 %v1310, %v1306
        %v1347 = vpack.c.b16 %v1315, %v1311
        %v1348 = vpack.c.b16 %v1316, %v1312
        %v1349 = vpack.c.b16 %v1317, %v1313
        %v1350 = vpack.c.b16 %v1318, %v1314
        %1383 = vmatprep.subr.bf16.mxu0 %v1320
        %1384 = vmatpush1.bf16.msra.mxu0 %v1319
        %1385 = vmatprep.subr.bf16.mxu0 %v1324
        %1386 = vmatpush1.bf16.msra.mxu0 %v1323
        %1387 = vmatprep.subr.bf16.mxu0 %v1328
        %1388 = vmatpush1.bf16.msra.mxu0 %v1327
        %1389 = vmatprep.subr.bf16.mxu0 %v1332
        %1390 = vmatpush1.bf16.msra.mxu0 %v1331
        %1391 = vmatprep.subr.bf16.mxu0 %v1336
        %1392 = vmatpush1.bf16.msra.mxu0 %v1335
        %1393 = vmatprep.subr.bf16.mxu0 %v1340
        %1394 = vmatpush1.bf16.msra.mxu0 %v1339
        %1395 = vmatprep.subr.bf16.mxu0 %v1344
        %1396 = vmatpush1.bf16.msra.mxu0 %v1343
        %1397 = vmatprep.subr.bf16.mxu0 %v1348
        %1398 = vmatpush1.bf16.msra.mxu0 %v1347
        %1399 = vmatprep.subr.bf16.mxu0 0
        %1400 = vmatpush1.bf16.msra.mxu0 0
        %1401 = vmatprep.subr.bf16.mxu0 0
        %1402 = vmatpush1.bf16.msra.mxu0 0
        %1403 = vmatprep.subr.bf16.mxu0 0
        %1404 = vmatpush1.bf16.msra.mxu0 0
        %1405 = vmatprep.subr.bf16.mxu0 0
        %1406 = vmatpush1.bf16.msra.mxu0 0
        %1407 = vmatprep.subr.bf16.mxu0 0
        %1408 = vmatpush1.bf16.msra.mxu0 0
        %1409 = vmatprep.subr.bf16.mxu0 0
        %1410 = vmatpush1.bf16.msra.mxu0 0
        %1411 = vmatprep.subr.bf16.mxu0 0
        %1412 = vmatpush1.bf16.msra.mxu0 0
        %1413 = vmatprep.subr.bf16.mxu0 0
        %1414 = vmatpush1.bf16.msra.mxu0 0
        %1415 = vmatprep.mubr.bf16.mxu0 0
        %1416 = vmatmul.mubr.bf16.gmra.mrb[0].mxu0 %v1165
        %v1417 = vpop.f32.mrb[0].mxu0
        %v1418 = vadd.f32 %v1206, %v1417
        %v1419 = vpop.f32.mrb[0].mxu0
        %v1420 = vadd.f32 %v1210, %v1419
        %v1421 = vpop.f32.mrb[0].mxu0
        %v1422 = vadd.f32 %v1206, %v1421
        %v1423 = vpop.f32.mrb[0].mxu0
        %v1424 = vadd.f32 %v1210, %v1423
        %1425 = vmatprep.mubr.bf16.mxu0 0
        %1426 = vmatmul.mubr.bf16.gmra.mrb[0].mxu0 %v1166
        %v1427 = vpop.f32.mrb[0].mxu0
        %v1428 = vadd.f32 %v1206, %v1427
        %v1429 = vpop.f32.mrb[0].mxu0
        %v1430 = vadd.f32 %v1210, %v1429
        %v1431 = vpop.f32.mrb[0].mxu0
        %v1432 = vadd.f32 %v1206, %v1431
        %v1433 = vpop.f32.mrb[0].mxu0
        %v1434 = vadd.f32 %v1210, %v1433
        %1435 = vmatprep.mubr.bf16.mxu0 0
        %1436 = vmatmul.mubr.bf16.gmra.mrb[0].mxu0 %v1167
        %v1437 = vpop.f32.mrb[0].mxu0
        %v1438 = vadd.f32 %v1206, %v1437
        %v1439 = vpop.f32.mrb[0].mxu0
        %v1440 = vadd.f32 %v1210, %v1439
        %v1441 = vpop.f32.mrb[0].mxu0
        %v1442 = vadd.f32 %v1206, %v1441
        %v1443 = vpop.f32.mrb[0].mxu0
        %v1444 = vadd.f32 %v1210, %v1443
        %1445 = vmatprep.mubr.bf16.mxu0 0
        %1446 = vmatmul.mubr.bf16.gmra.mrb[0].mxu0 %v1168
        %v1447 = vpop.f32.mrb[0].mxu0
        %v1448 = vadd.f32 %v1206, %v1447
        %v1449 = vpop.f32.mrb[0].mxu0
        %v1450 = vadd.f32 %v1210, %v1449
        %v1451 = vpop.f32.mrb[0].mxu0
        %v1452 = vadd.f32 %v1206, %v1451
        %v1453 = vpop.f32.mrb[0].mxu0
        %v1454 = vadd.f32 %v1210, %v1453
        %1455 = vdwg.mxu0
        %1456 = vmatprep.subr.bf16.mxu0 %v1322
        %1457 = vmatpush1.bf16.msra.mxu0 %v1321
        %1458 = vmatprep.subr.bf16.mxu0 %v1326
        %1459 = vmatpush1.bf16.msra.mxu0 %v1325
        %1460 = vmatprep.subr.bf16.mxu0 %v1330
        %1461 = vmatpush1.bf16.msra.mxu0 %v1329
        %1462 = vmatprep.subr.bf16.mxu0 %v1334
        %1463 = vmatpush1.bf16.msra.mxu0 %v1333
        %1464 = vmatprep.subr.bf16.mxu0 %v1338
        %1465 = vmatpush1.bf16.msra.mxu0 %v1337
        %1466 = vmatprep.subr.bf16.mxu0 %v1342
        %1467 = vmatpush1.bf16.msra.mxu0 %v1341
        %1468 = vmatprep.subr.bf16.mxu0 %v1346
        %1469 = vmatpush1.bf16.msra.mxu0 %v1345
        %1470 = vmatprep.subr.bf16.mxu0 %v1350
        %1471 = vmatpush1.bf16.msra.mxu0 %v1349
        %1472 = vmatprep.subr.bf16.mxu0 0
        %1473 = vmatpush1.bf16.msra.mxu0 0
        %1474 = vmatprep.subr.bf16.mxu0 0
        %1475 = vmatpush1.bf16.msra.mxu0 0
        %1476 = vmatprep.subr.bf16.mxu0 0
        %1477 = vmatpush1.bf16.msra.mxu0 0
        %1478 = vmatprep.subr.bf16.mxu0 0
        %1479 = vmatpush1.bf16.msra.mxu0 0
        %1480 = vmatprep.subr.bf16.mxu0 0
        %1481 = vmatpush1.bf16.msra.mxu0 0
        %1482 = vmatprep.subr.bf16.mxu0 0
        %1483 = vmatpush1.bf16.msra.mxu0 0
        %1484 = vmatprep.subr.bf16.mxu0 0
        %1485 = vmatpush1.bf16.msra.mxu0 0
        %1486 = vmatprep.subr.bf16.mxu0 0
        %1487 = vmatpush1.bf16.msra.mxu0 0
        %1488 = vmatprep.mubr.bf16.mxu0 0
        %1489 = vmatmul.mubr.bf16.gmra.mrb[0].mxu0 %v1165
        %v1490 = vpop.f32.mrb[0].mxu0
        %v1491 = vadd.f32 %v1214, %v1490
        %v1492 = vpop.f32.mrb[0].mxu0
        %v1493 = vadd.f32 %v1218, %v1492
        %v1494 = vpop.f32.mrb[0].mxu0
        %v1495 = vadd.f32 %v1214, %v1494
        %v1496 = vpop.f32.mrb[0].mxu0
        %v1497 = vadd.f32 %v1218, %v1496
        %1498 = vmatprep.mubr.bf16.mxu0 0
        %1499 = vmatmul.mubr.bf16.gmra.mrb[0].mxu0 %v1166
        %v1500 = vpop.f32.mrb[0].mxu0
        %v1501 = vadd.f32 %v1214, %v1500
        %v1502 = vpop.f32.mrb[0].mxu0
        %v1503 = vadd.f32 %v1218, %v1502
        %v1504 = vpop.f32.mrb[0].mxu0
        %v1505 = vadd.f32 %v1214, %v1504
        %v1506 = vpop.f32.mrb[0].mxu0
        %v1507 = vadd.f32 %v1218, %v1506
        %1508 = vmatprep.mubr.bf16.mxu0 0
        %1509 = vmatmul.mubr.bf16.gmra.mrb[0].mxu0 %v1167
        %v1510 = vpop.f32.mrb[0].mxu0
        %v1511 = vadd.f32 %v1214, %v1510
        %v1512 = vpop.f32.mrb[0].mxu0
        %v1513 = vadd.f32 %v1218, %v1512
        %v1514 = vpop.f32.mrb[0].mxu0
        %v1515 = vadd.f32 %v1214, %v1514
        %v1516 = vpop.f32.mrb[0].mxu0
        %v1517 = vadd.f32 %v1218, %v1516
        %1518 = vmatprep.mubr.bf16.mxu0 0
        %1519 = vmatmul.mubr.bf16.gmra.mrb[0].mxu0 %v1168
        %v1520 = vpop.f32.mrb[0].mxu0
        %v1521 = vadd.f32 %v1214, %v1520
        %v1522 = vpop.f32.mrb[0].mxu0
        %v1523 = vadd.f32 %v1218, %v1522
        %v1524 = vpop.f32.mrb[0].mxu0
        %v1525 = vadd.f32 %v1214, %v1524
        %v1526 = vpop.f32.mrb[0].mxu0
        %v1527 = vadd.f32 %v1218, %v1526
        %1528 = vdwg.mxu0
        %1529 = vst [vmem:[#allocation3] sm:$0xff] %v1418
        %1530 = vst [vmem:[#allocation3 + $0x8] sm:$0xff] %v1420
        %1531 = vst [vmem:[#allocation3 + $0x10] sm:$0xff] %v1491
        %1532 = vst [vmem:[#allocation3 + $0x18] sm:$0xff] %v1493
        %1533 = vst [vmem:[#allocation3 + $0x20] sm:$0xff] %v1422
        %1534 = vst [vmem:[#allocation3 + $0x28] sm:$0xff] %v1424
        %1535 = vst [vmem:[#allocation3 + $0x30] sm:$0xff] %v1495
        %1536 = vst [vmem:[#allocation3 + $0x38] sm:$0xff] %v1497
        %1537 = vst [vmem:[#allocation3 + $0x40] sm:$0xff] %v1428
        %1538 = vst [vmem:[#allocation3 + $0x48] sm:$0xff] %v1430
        %1539 = vst [vmem:[#allocation3 + $0x50] sm:$0xff] %v1501
        %1540 = vst [vmem:[#allocation3 + $0x58] sm:$0xff] %v1503
        %1541 = vst [vmem:[#allocation3 + $0x60] sm:$0xff] %v1432
        %1542 = vst [vmem:[#allocation3 + $0x68] sm:$0xff] %v1434
        %1543 = vst [vmem:[#allocation3 + $0x70] sm:$0xff] %v1505
        %1544 = vst [vmem:[#allocation3 + $0x78] sm:$0xff] %v1507
        %1545 = vst [vmem:[#allocation3 + $0x80] sm:$0xff] %v1438
        %1546 = vst [vmem:[#allocation3 + $0x88] sm:$0xff] %v1440
        %1547 = vst [vmem:[#allocation3 + $0x90] sm:$0xff] %v1511
        %1548 = vst [vmem:[#allocation3 + $0x98] sm:$0xff] %v1513
        %1549 = vst [vmem:[#allocation3 + $0xa0] sm:$0xff] %v1442
        %1550 = vst [vmem:[#allocation3 + $0xa8] sm:$0xff] %v1444
        %1551 = vst [vmem:[#allocation3 + $0xb0] sm:$0xff] %v1515
        %1552 = vst [vmem:[#allocation3 + $0xb8] sm:$0xff] %v1517
        %1553 = vst [vmem:[#allocation3 + $0xc0] sm:$0xff] %v1448
        %1554 = vst [vmem:[#allocation3 + $0xc8] sm:$0xff] %v1450
        %1555 = vst [vmem:[#allocation3 + $0xd0] sm:$0xff] %v1521
        %1556 = vst [vmem:[#allocation3 + $0xd8] sm:$0xff] %v1523
        %1557 = vst [vmem:[#allocation3 + $0xe0] sm:$0xff] %v1452
        %1558 = vst [vmem:[#allocation3 + $0xe8] sm:$0xff] %v1454
        %1559 = vst [vmem:[#allocation3 + $0xf0] sm:$0xff] %v1525
        %1560 = vst [vmem:[#allocation3 + $0xf8] sm:$0xff] %v1527
        %v1561 = vld [vmem:[#allocation16] sm:$0xff]
        %v1562 = vld [vmem:[#allocation16 + $0x8] sm:$0xff]
        %v1563 = vld [vmem:[#allocation16 + $0x10] sm:$0xff]
        %v1564 = vld [vmem:[#allocation16 + $0x18] sm:$0xff]
        %v1565 = vld [vmem:[#allocation16 + $0x20] sm:$0xff]
        %v1566 = vld [vmem:[#allocation16 + $0x28] sm:$0xff]
        %v1567 = vld [vmem:[#allocation16 + $0x30] sm:$0xff]
        %v1568 = vld [vmem:[#allocation16 + $0x38] sm:$0xff]
        %v1569 = vld [vmem:[#allocation16 + $0x40] sm:$0xff]
        %v1570 = vld [vmem:[#allocation16 + $0x48] sm:$0xff]
        %v1571 = vld [vmem:[#allocation16 + $0x50] sm:$0xff]
        %v1572 = vld [vmem:[#allocation16 + $0x58] sm:$0xff]
        %v1573 = vld [vmem:[#allocation16 + $0x60] sm:$0xff]
        %v1574 = vld [vmem:[#allocation16 + $0x68] sm:$0xff]
        %v1575 = vld [vmem:[#allocation16 + $0x70] sm:$0xff]
        %v1576 = vld [vmem:[#allocation16 + $0x78] sm:$0xff]
        %v1577 = vld [vmem:[#allocation16 + $0x80] sm:$0xff]
        %v1578 = vld [vmem:[#allocation16 + $0x88] sm:$0xff]
        %v1579 = vld [vmem:[#allocation16 + $0x90] sm:$0xff]
        %v1580 = vld [vmem:[#allocation16 + $0x98] sm:$0xff]
        %v1581 = vld [vmem:[#allocation16 + $0xa0] sm:$0xff]
        %v1582 = vld [vmem:[#allocation16 + $0xa8] sm:$0xff]
        %v1583 = vld [vmem:[#allocation16 + $0xb0] sm:$0xff]
        %v1584 = vld [vmem:[#allocation16 + $0xb8] sm:$0xff]
        %v1585 = vld [vmem:[#allocation16 + $0xc0] sm:$0xff]
        %v1586 = vld [vmem:[#allocation16 + $0xc8] sm:$0xff]
        %v1587 = vld [vmem:[#allocation16 + $0xd0] sm:$0xff]
        %v1588 = vld [vmem:[#allocation16 + $0xd8] sm:$0xff]
        %v1589 = vld [vmem:[#allocation16 + $0xe0] sm:$0xff]
        %v1590 = vld [vmem:[#allocation16 + $0xe8] sm:$0xff]
        %v1591 = vld [vmem:[#allocation16 + $0xf0] sm:$0xff]
        %v1592 = vld [vmem:[#allocation16 + $0xf8] sm:$0xff]
        %v1593 = vld [vmem:[#allocation3] sm:$0xff]
        %v1594 = vld [vmem:[#allocation3 + $0x8] sm:$0xff]
        %v1595 = vld [vmem:[#allocation3 + $0x10] sm:$0xff]
        %v1596 = vld [vmem:[#allocation3 + $0x18] sm:$0xff]
        %v1597 = vld [vmem:[#allocation3 + $0x20] sm:$0xff]
        %v1598 = vld [vmem:[#allocation3 + $0x28] sm:$0xff]
        %v1599 = vld [vmem:[#allocation3 + $0x30] sm:$0xff]
        %v1600 = vld [vmem:[#allocation3 + $0x38] sm:$0xff]
        %v1601 = vld [vmem:[#allocation3 + $0x40] sm:$0xff]
        %v1602 = vld [vmem:[#allocation3 + $0x48] sm:$0xff]
        %v1603 = vld [vmem:[#allocation3 + $0x50] sm:$0xff]
        %v1604 = vld [vmem:[#allocation3 + $0x58] sm:$0xff]
        %v1605 = vld [vmem:[#allocation3 + $0x60] sm:$0xff]
        %v1606 = vld [vmem:[#allocation3 + $0x68] sm:$0xff]
        %v1607 = vld [vmem:[#allocation3 + $0x70] sm:$0xff]
        %v1608 = vld [vmem:[#allocation3 + $0x78] sm:$0xff]
        %v1641 = vunpack.c.l.b16 %v1561
        %v1642 = vunpack.c.h.b16 %v1561
        %v1643 = vunpack.c.l.b16 %v1562
        %v1644 = vunpack.c.h.b16 %v1562
        %v1645 = vunpack.c.l.b16 %v1563
        %v1646 = vunpack.c.h.b16 %v1563
        %v1647 = vunpack.c.l.b16 %v1564
        %v1648 = vunpack.c.h.b16 %v1564
        %v1649 = vunpack.c.l.b16 %v1565
        %v1650 = vunpack.c.h.b16 %v1565
        %v1651 = vunpack.c.l.b16 %v1566
        %v1652 = vunpack.c.h.b16 %v1566
        %v1653 = vunpack.c.l.b16 %v1567
        %v1654 = vunpack.c.h.b16 %v1567
        %v1655 = vunpack.c.l.b16 %v1568
        %v1656 = vunpack.c.h.b16 %v1568
        %v1657 = vunpack.c.l.b16 %v1569
        %v1658 = vunpack.c.h.b16 %v1569
        %v1659 = vunpack.c.l.b16 %v1570
        %v1660 = vunpack.c.h.b16 %v1570
        %v1661 = vunpack.c.l.b16 %v1571
        %v1662 = vunpack.c.h.b16 %v1571
        %v1663 = vunpack.c.l.b16 %v1572
        %v1664 = vunpack.c.h.b16 %v1572
        %v1665 = vunpack.c.l.b16 %v1573
        %v1666 = vunpack.c.h.b16 %v1573
        %v1667 = vunpack.c.l.b16 %v1574
        %v1668 = vunpack.c.h.b16 %v1574
        %v1669 = vunpack.c.l.b16 %v1575
        %v1670 = vunpack.c.h.b16 %v1575
        %v1671 = vunpack.c.l.b16 %v1576
        %v1672 = vunpack.c.h.b16 %v1576
        %v1673 = vunpack.c.l.b16 %v1577
        %v1674 = vunpack.c.h.b16 %v1577
        %v1675 = vunpack.c.l.b16 %v1578
        %v1676 = vunpack.c.h.b16 %v1578
        %v1677 = vunpack.c.l.b16 %v1579
        %v1678 = vunpack.c.h.b16 %v1579
        %v1679 = vunpack.c.l.b16 %v1580
        %v1680 = vunpack.c.h.b16 %v1580
        %v1681 = vunpack.c.l.b16 %v1581
        %v1682 = vunpack.c.h.b16 %v1581
        %v1683 = vunpack.c.l.b16 %v1582
        %v1684 = vunpack.c.h.b16 %v1582
        %v1685 = vunpack.c.l.b16 %v1583
        %v1686 = vunpack.c.h.b16 %v1583
        %v1687 = vunpack.c.l.b16 %v1584
        %v1688 = vunpack.c.h.b16 %v1584
        %v1689 = vunpack.c.l.b16 %v1585
        %v1690 = vunpack.c.h.b16 %v1585
        %v1691 = vunpack.c.l.b16 %v1586
        %v1692 = vunpack.c.h.b16 %v1586
        %v1693 = vunpack.c.l.b16 %v1587
        %v1694 = vunpack.c.h.b16 %v1587
        %v1695 = vunpack.c.l.b16 %v1588
        %v1696 = vunpack.c.h.b16 %v1588
        %v1697 = vunpack.c.l.b16 %v1589
        %v1698 = vunpack.c.h.b16 %v1589
        %v1699 = vunpack.c.l.b16 %v1590
        %v1700 = vunpack.c.h.b16 %v1590
        %v1701 = vunpack.c.l.b16 %v1591
        %v1702 = vunpack.c.h.b16 %v1591
        %v1703 = vunpack.c.l.b16 %v1592
        %v1704 = vunpack.c.h.b16 %v1592
        %v1705 = vpack.c.b16 %v1645, %v1641
        %v1706 = vpack.c.b16 %v1646, %v1642
        %v1707 = vpack.c.b16 %v1647, %v1643
        %v1708 = vpack.c.b16 %v1648, %v1644
        %v1709 = vpack.c.b16 %v1653, %v1649
        %v1710 = vpack.c.b16 %v1654, %v1650
        %v1711 = vpack.c.b16 %v1655, %v1651
        %v1712 = vpack.c.b16 %v1656, %v1652
        %v1713 = vpack.c.b16 %v1661, %v1657
        %v1714 = vpack.c.b16 %v1662, %v1658
        %v1715 = vpack.c.b16 %v1663, %v1659
        %v1716 = vpack.c.b16 %v1664, %v1660
        %v1717 = vpack.c.b16 %v1669, %v1665
        %v1718 = vpack.c.b16 %v1670, %v1666
        %v1719 = vpack.c.b16 %v1671, %v1667
        %v1720 = vpack.c.b16 %v1672, %v1668
        %v1721 = vpack.c.b16 %v1677, %v1673
        %v1722 = vpack.c.b16 %v1678, %v1674
        %v1723 = vpack.c.b16 %v1679, %v1675
        %v1724 = vpack.c.b16 %v1680, %v1676
        %v1725 = vpack.c.b16 %v1685, %v1681
        %v1726 = vpack.c.b16 %v1686, %v1682
        %v1727 = vpack.c.b16 %v1687, %v1683
        %v1728 = vpack.c.b16 %v1688, %v1684
        %v1729 = vpack.c.b16 %v1693, %v1689
        %v1730 = vpack.c.b16 %v1694, %v1690
        %v1731 = vpack.c.b16 %v1695, %v1691
        %v1732 = vpack.c.b16 %v1696, %v1692
        %v1733 = vpack.c.b16 %v1701, %v1697
        %v1734 = vpack.c.b16 %v1702, %v1698
        %v1735 = vpack.c.b16 %v1703, %v1699
        %v1736 = vpack.c.b16 %v1704, %v1700
        %1769 = vmatprep.subr.bf16.mxu0 %v1706
        %1770 = vmatpush1.bf16.msra.mxu0 %v1705
        %1771 = vmatprep.subr.bf16.mxu0 %v1710
        %1772 = vmatpush1.bf16.msra.mxu0 %v1709
        %1773 = vmatprep.subr.bf16.mxu0 %v1714
        %1774 = vmatpush1.bf16.msra.mxu0 %v1713
        %1775 = vmatprep.subr.bf16.mxu0 %v1718
        %1776 = vmatpush1.bf16.msra.mxu0 %v1717
        %1777 = vmatprep.subr.bf16.mxu0 %v1722
        %1778 = vmatpush1.bf16.msra.mxu0 %v1721
        %1779 = vmatprep.subr.bf16.mxu0 %v1726
        %1780 = vmatpush1.bf16.msra.mxu0 %v1725
        %1781 = vmatprep.subr.bf16.mxu0 %v1730
        %1782 = vmatpush1.bf16.msra.mxu0 %v1729
        %1783 = vmatprep.subr.bf16.mxu0 %v1734
        %1784 = vmatpush1.bf16.msra.mxu0 %v1733
        %1785 = vmatprep.subr.bf16.mxu0 0
        %1786 = vmatpush1.bf16.msra.mxu0 0
        %1787 = vmatprep.subr.bf16.mxu0 0
        %1788 = vmatpush1.bf16.msra.mxu0 0
        %1789 = vmatprep.subr.bf16.mxu0 0
        %1790 = vmatpush1.bf16.msra.mxu0 0
        %1791 = vmatprep.subr.bf16.mxu0 0
        %1792 = vmatpush1.bf16.msra.mxu0 0
        %1793 = vmatprep.subr.bf16.mxu0 0
        %1794 = vmatpush1.bf16.msra.mxu0 0
        %1795 = vmatprep.subr.bf16.mxu0 0
        %1796 = vmatpush1.bf16.msra.mxu0 0
        %1797 = vmatprep.subr.bf16.mxu0 0
        %1798 = vmatpush1.bf16.msra.mxu0 0
        %1799 = vmatprep.subr.bf16.mxu0 0
        %1800 = vmatpush1.bf16.msra.mxu0 0
        %1801 = vmatprep.mubr.bf16.mxu0 0
        %1802 = vmatmul.mubr.bf16.gmra.mrb[0].mxu0 0
        %v1803 = vpop.f32.mrb[0].mxu0
        %v1804 = vadd.f32 0.0, %v1803
        %v1805 = vpop.f32.mrb[0].mxu0
        %v1806 = vadd.f32 0.0, %v1805
        %v1807 = vpop.f32.mrb[0].mxu0
        %v1808 = vadd.f32 0.0, %v1807
        %v1809 = vpop.f32.mrb[0].mxu0
        %v1810 = vadd.f32 0.0, %v1809
        %1811 = vmatprep.mubr.bf16.mxu0 0
        %1812 = vmatmul.mubr.bf16.gmra.mrb[0].mxu0 0
        %v1813 = vpop.f32.mrb[0].mxu0
        %v1814 = vadd.f32 0.0, %v1813
        %v1815 = vpop.f32.mrb[0].mxu0
        %v1816 = vadd.f32 0.0, %v1815
        %v1817 = vpop.f32.mrb[0].mxu0
        %v1818 = vadd.f32 0.0, %v1817
        %v1819 = vpop.f32.mrb[0].mxu0
        %v1820 = vadd.f32 0.0, %v1819
        %1821 = vdwg.mxu0
        %1822 = vmatprep.subr.bf16.mxu0 %v1708
        %1823 = vmatpush1.bf16.msra.mxu0 %v1707
        %1824 = vmatprep.subr.bf16.mxu0 %v1712
        %1825 = vmatpush1.bf16.msra.mxu0 %v1711
        %1826 = vmatprep.subr.bf16.mxu0 %v1716
        %1827 = vmatpush1.bf16.msra.mxu0 %v1715
        %1828 = vmatprep.subr.bf16.mxu0 %v1720
        %1829 = vmatpush1.bf16.msra.mxu0 %v1719
        %1830 = vmatprep.subr.bf16.mxu0 %v1724
        %1831 = vmatpush1.bf16.msra.mxu0 %v1723
        %1832 = vmatprep.subr.bf16.mxu0 %v1728
        %1833 = vmatpush1.bf16.msra.mxu0 %v1727
        %1834 = vmatprep.subr.bf16.mxu0 %v1732
        %1835 = vmatpush1.bf16.msra.mxu0 %v1731
        %1836 = vmatprep.subr.bf16.mxu0 %v1736
        %1837 = vmatpush1.bf16.msra.mxu0 %v1735
        %1838 = vmatprep.subr.bf16.mxu0 0
        %1839 = vmatpush1.bf16.msra.mxu0 0
        %1840 = vmatprep.subr.bf16.mxu0 0
        %1841 = vmatpush1.bf16.msra.mxu0 0
        %1842 = vmatprep.subr.bf16.mxu0 0
        %1843 = vmatpush1.bf16.msra.mxu0 0
        %1844 = vmatprep.subr.bf16.mxu0 0
        %1845 = vmatpush1.bf16.msra.mxu0 0
        %1846 = vmatprep.subr.bf16.mxu0 0
        %1847 = vmatpush1.bf16.msra.mxu0 0
        %1848 = vmatprep.subr.bf16.mxu0 0
        %1849 = vmatpush1.bf16.msra.mxu0 0
        %1850 = vmatprep.subr.bf16.mxu0 0
        %1851 = vmatpush1.bf16.msra.mxu0 0
        %1852 = vmatprep.subr.bf16.mxu0 0
        %1853 = vmatpush1.bf16.msra.mxu0 0
        %1854 = vmatprep.mubr.bf16.mxu0 0
        %1855 = vmatmul.mubr.bf16.gmra.mrb[0].mxu0 0
        %v1856 = vpop.f32.mrb[0].mxu0
        %v1857 = vadd.f32 0.0, %v1856
        %v1858 = vpop.f32.mrb[0].mxu0
        %v1859 = vadd.f32 0.0, %v1858
        %v1860 = vpop.f32.mrb[0].mxu0
        %v1861 = vadd.f32 0.0, %v1860
        %v1862 = vpop.f32.mrb[0].mxu0
        %v1863 = vadd.f32 0.0, %v1862
        %1864 = vmatprep.mubr.bf16.mxu0 0
        %1865 = vmatmul.mubr.bf16.gmra.mrb[0].mxu0 0
        %v1866 = vpop.f32.mrb[0].mxu0
        %v1867 = vadd.f32 0.0, %v1866
        %v1868 = vpop.f32.mrb[0].mxu0
        %v1869 = vadd.f32 0.0, %v1868
        %v1870 = vpop.f32.mrb[0].mxu0
        %v1871 = vadd.f32 0.0, %v1870
        %v1872 = vpop.f32.mrb[0].mxu0
        %v1873 = vadd.f32 0.0, %v1872
        %1874 = vdwg.mxu0
        %v1875 = vadd.f32 %v1593, %v1804
        %v1876 = vadd.f32 %v1594, %v1806
        %v1877 = vadd.f32 %v1595, %v1857
        %v1878 = vadd.f32 %v1596, %v1859
        %v1879 = vadd.f32 %v1597, %v1808
        %v1880 = vadd.f32 %v1598, %v1810
        %v1881 = vadd.f32 %v1599, %v1861
        %v1882 = vadd.f32 %v1600, %v1863
        %v1883 = vadd.f32 %v1601, %v1814
        %v1884 = vadd.f32 %v1602, %v1816
        %v1885 = vadd.f32 %v1603, %v1867
        %v1886 = vadd.f32 %v1604, %v1869
        %v1887 = vadd.f32 %v1605, %v1818
        %v1888 = vadd.f32 %v1606, %v1820
        %v1889 = vadd.f32 %v1607, %v1871
        %v1890 = vadd.f32 %v1608, %v1873
        %v1891 = vmul.f32 %v1875, 0.5
        %v1892 = vmul.f32 %v1879, 0.5
        %v1893 = vmul.f32 %v1883, 0.5
        %v1894 = vmul.f32 %v1887, 0.5
        %v1895 = vtanh.pop %v1891
        %v1896 = vtanh.pop %v1892
        %v1897 = vtanh.pop %v1893
        %v1898 = vtanh.pop %v1894
        %v1899 = vmul.f32 %v1895, 0.5
        %v1900 = vmul.f32 %v1896, 0.5
        %v1901 = vmul.f32 %v1897, 0.5
        %v1902 = vmul.f32 %v1898, 0.5
        %v1903 = vadd.f32 %v1899, 0.5
        %v1904 = vadd.f32 %v1900, 0.5
        %v1905 = vadd.f32 %v1901, 0.5
        %v1906 = vadd.f32 %v1902, 0.5
        %v1907 = vmul.f32 %v1876, 0.5
        %v1908 = vmul.f32 %v1880, 0.5
        %v1909 = vmul.f32 %v1884, 0.5
        %v1910 = vmul.f32 %v1888, 0.5
        %v1911 = vtanh.pop %v1907
        %v1912 = vtanh.pop %v1908
        %v1913 = vtanh.pop %v1909
        %v1914 = vtanh.pop %v1910
        %v1915 = vmul.f32 %v1911, 0.5
        %v1916 = vmul.f32 %v1912, 0.5
        %v1917 = vmul.f32 %v1913, 0.5
        %v1918 = vmul.f32 %v1914, 0.5
        %v1919 = vadd.f32 %v1915, 0.5
        %v1920 = vadd.f32 %v1916, 0.5
        %v1921 = vadd.f32 %v1917, 0.5
        %v1922 = vadd.f32 %v1918, 0.5
        %v1923 = vtanh.pop %v1877
        %v1924 = vtanh.pop %v1881
        %v1925 = vtanh.pop %v1885
        %v1926 = vtanh.pop %v1889
        %v1927 = vmul.f32 %v1878, 0.5
        %v1928 = vmul.f32 %v1882, 0.5
        %v1929 = vmul.f32 %v1886, 0.5
        %v1930 = vmul.f32 %v1890, 0.5
        %v1931 = vtanh.pop %v1927
        %v1932 = vtanh.pop %v1928
        %v1933 = vtanh.pop %v1929
        %v1934 = vtanh.pop %v1930
        %v1935 = vmul.f32 %v1931, 0.5
        %v1936 = vmul.f32 %v1932, 0.5
        %v1937 = vmul.f32 %v1933, 0.5
        %v1938 = vmul.f32 %v1934, 0.5
        %v1939 = vadd.f32 %v1935, 0.5
        %v1940 = vadd.f32 %v1936, 0.5
        %v1941 = vadd.f32 %v1937, 0.5
        %v1942 = vadd.f32 %v1938, 0.5
        %v1943 = vmul.f32 %v1919, 0.0
        %v1944 = vmul.f32 %v1920, 0.0
        %v1945 = vmul.f32 %v1921, 0.0
        %v1946 = vmul.f32 %v1922, 0.0
        %v1947 = vmul.f32 %v1903, %v1923
        %v1948 = vmul.f32 %v1904, %v1924
        %v1949 = vmul.f32 %v1905, %v1925
        %v1950 = vmul.f32 %v1906, %v1926
        %v1951 = vadd.f32 %v1943, %v1947
        %v1952 = vadd.f32 %v1944, %v1948
        %v1953 = vadd.f32 %v1945, %v1949
        %v1954 = vadd.f32 %v1946, %v1950
        %v1955 = vtanh.pop %v1951
        %v1956 = vtanh.pop %v1952
        %v1957 = vtanh.pop %v1953
        %v1958 = vtanh.pop %v1954
        %v1959 = vmul.f32 %v1939, %v1955
        %v1960 = vmul.f32 %v1940, %v1956
        %v1961 = vmul.f32 %v1941, %v1957
        %v1962 = vmul.f32 %v1942, %v1958
        %v1963 = vpack.c.bf16 %v1960, %v1959
        %v1964 = vpack.c.bf16 %v1962, %v1961
        %1965 = vst [vmem:[#allocation4] sm:$0xff] %v1963
        %1966 = vst [vmem:[#allocation4 + $0x8] sm:$0xff] %v1964
        %s1967 = scalar_lea.vmem [#allocation3], 128
        %v1968 = vld [vmem:[%s1967] sm:$0xff]
        %v1969 = vld [vmem:[%s1967 + $0x8] sm:$0xff]
        %v1970 = vld [vmem:[%s1967 + $0x10] sm:$0xff]
        %v1971 = vld [vmem:[%s1967 + $0x18] sm:$0xff]
        %v1972 = vld [vmem:[%s1967 + $0x20] sm:$0xff]
        %v1973 = vld [vmem:[%s1967 + $0x28] sm:$0xff]
        %v1974 = vld [vmem:[%s1967 + $0x30] sm:$0xff]
        %v1975 = vld [vmem:[%s1967 + $0x38] sm:$0xff]
        %v1976 = vld [vmem:[%s1967 + $0x40] sm:$0xff]
        %v1977 = vld [vmem:[%s1967 + $0x48] sm:$0xff]
        %v1978 = vld [vmem:[%s1967 + $0x50] sm:$0xff]
        %v1979 = vld [vmem:[%s1967 + $0x58] sm:$0xff]
        %v1980 = vld [vmem:[%s1967 + $0x60] sm:$0xff]
        %v1981 = vld [vmem:[%s1967 + $0x68] sm:$0xff]
        %v1982 = vld [vmem:[%s1967 + $0x70] sm:$0xff]
        %v1983 = vld [vmem:[%s1967 + $0x78] sm:$0xff]
        %1984 = vmatprep.subr.bf16.mxu0 %v1706
        %1985 = vmatpush1.bf16.msra.mxu0 %v1705
        %1986 = vmatprep.subr.bf16.mxu0 %v1710
        %1987 = vmatpush1.bf16.msra.mxu0 %v1709
        %1988 = vmatprep.subr.bf16.mxu0 %v1714
        %1989 = vmatpush1.bf16.msra.mxu0 %v1713
        %1990 = vmatprep.subr.bf16.mxu0 %v1718
        %1991 = vmatpush1.bf16.msra.mxu0 %v1717
        %1992 = vmatprep.subr.bf16.mxu0 %v1722
        %1993 = vmatpush1.bf16.msra.mxu0 %v1721
        %1994 = vmatprep.subr.bf16.mxu0 %v1726
        %1995 = vmatpush1.bf16.msra.mxu0 %v1725
        %1996 = vmatprep.subr.bf16.mxu0 %v1730
        %1997 = vmatpush1.bf16.msra.mxu0 %v1729
        %1998 = vmatprep.subr.bf16.mxu0 %v1734
        %1999 = vmatpush1.bf16.msra.mxu0 %v1733
        %2000 = vmatprep.subr.bf16.mxu0 0
        %2001 = vmatpush1.bf16.msra.mxu0 0
        %2002 = vmatprep.subr.bf16.mxu0 0
        %2003 = vmatpush1.bf16.msra.mxu0 0
        %2004 = vmatprep.subr.bf16.mxu0 0
        %2005 = vmatpush1.bf16.msra.mxu0 0
        %2006 = vmatprep.subr.bf16.mxu0 0
        %2007 = vmatpush1.bf16.msra.mxu0 0
        %2008 = vmatprep.subr.bf16.mxu0 0
        %2009 = vmatpush1.bf16.msra.mxu0 0
        %2010 = vmatprep.subr.bf16.mxu0 0
        %2011 = vmatpush1.bf16.msra.mxu0 0
        %2012 = vmatprep.subr.bf16.mxu0 0
        %2013 = vmatpush1.bf16.msra.mxu0 0
        %2014 = vmatprep.subr.bf16.mxu0 0
        %2015 = vmatpush1.bf16.msra.mxu0 0
        %2016 = vmatprep.mubr.bf16.mxu0 0
        %2017 = vmatmul.mubr.bf16.gmra.mrb[0].mxu0 %v1963
        %v2018 = vpop.f32.mrb[0].mxu0
        %v2019 = vadd.f32 0.0, %v2018
        %v2020 = vpop.f32.mrb[0].mxu0
        %v2021 = vadd.f32 0.0, %v2020
        %v2022 = vpop.f32.mrb[0].mxu0
        %v2023 = vadd.f32 0.0, %v2022
        %v2024 = vpop.f32.mrb[0].mxu0
        %v2025 = vadd.f32 0.0, %v2024
        %2026 = vmatprep.mubr.bf16.mxu0 0
        %2027 = vmatmul.mubr.bf16.gmra.mrb[0].mxu0 %v1964
        %v2028 = vpop.f32.mrb[0].mxu0
        %v2029 = vadd.f32 0.0, %v2028
        %v2030 = vpop.f32.mrb[0].mxu0
        %v2031 = vadd.f32 0.0, %v2030
        %v2032 = vpop.f32.mrb[0].mxu0
        %v2033 = vadd.f32 0.0, %v2032
        %v2034 = vpop.f32.mrb[0].mxu0
        %v2035 = vadd.f32 0.0, %v2034
        %2036 = vdwg.mxu0
        %2037 = vmatprep.subr.bf16.mxu0 %v1708
        %2038 = vmatpush1.bf16.msra.mxu0 %v1707
        %2039 = vmatprep.subr.bf16.mxu0 %v1712
        %2040 = vmatpush1.bf16.msra.mxu0 %v1711
        %2041 = vmatprep.subr.bf16.mxu0 %v1716
        %2042 = vmatpush1.bf16.msra.mxu0 %v1715
        %2043 = vmatprep.subr.bf16.mxu0 %v1720
        %2044 = vmatpush1.bf16.msra.mxu0 %v1719
        %2045 = vmatprep.subr.bf16.mxu0 %v1724
        %2046 = vmatpush1.bf16.msra.mxu0 %v1723
        %2047 = vmatprep.subr.bf16.mxu0 %v1728
        %2048 = vmatpush1.bf16.msra.mxu0 %v1727
        %2049 = vmatprep.subr.bf16.mxu0 %v1732
        %2050 = vmatpush1.bf16.msra.mxu0 %v1731
        %2051 = vmatprep.subr.bf16.mxu0 %v1736
        %2052 = vmatpush1.bf16.msra.mxu0 %v1735
        %2053 = vmatprep.subr.bf16.mxu0 0
        %2054 = vmatpush1.bf16.msra.mxu0 0
        %2055 = vmatprep.subr.bf16.mxu0 0
        %2056 = vmatpush1.bf16.msra.mxu0 0
        %2057 = vmatprep.subr.bf16.mxu0 0
        %2058 = vmatpush1.bf16.msra.mxu0 0
        %2059 = vmatprep.subr.bf16.mxu0 0
        %2060 = vmatpush1.bf16.msra.mxu0 0
        %2061 = vmatprep.subr.bf16.mxu0 0
        %2062 = vmatpush1.bf16.msra.mxu0 0
        %2063 = vmatprep.subr.bf16.mxu0 0
        %2064 = vmatpush1.bf16.msra.mxu0 0
        %2065 = vmatprep.subr.bf16.mxu0 0
        %2066 = vmatpush1.bf16.msra.mxu0 0
        %2067 = vmatprep.subr.bf16.mxu0 0
        %2068 = vmatpush1.bf16.msra.mxu0 0
        %2069 = vmatprep.mubr.bf16.mxu0 0
        %2070 = vmatmul.mubr.bf16.gmra.mrb[0].mxu0 %v1963
        %v2071 = vpop.f32.mrb[0].mxu0
        %v2072 = vadd.f32 0.0, %v2071
        %v2073 = vpop.f32.mrb[0].mxu0
        %v2074 = vadd.f32 0.0, %v2073
        %v2075 = vpop.f32.mrb[0].mxu0
        %v2076 = vadd.f32 0.0, %v2075
        %v2077 = vpop.f32.mrb[0].mxu0
        %v2078 = vadd.f32 0.0, %v2077
        %2079 = vmatprep.mubr.bf16.mxu0 0
        %2080 = vmatmul.mubr.bf16.gmra.mrb[0].mxu0 %v1964
        %v2081 = vpop.f32.mrb[0].mxu0
        %v2082 = vadd.f32 0.0, %v2081
        %v2083 = vpop.f32.mrb[0].mxu0
        %v2084 = vadd.f32 0.0, %v2083
        %v2085 = vpop.f32.mrb[0].mxu0
        %v2086 = vadd.f32 0.0, %v2085
        %v2087 = vpop.f32.mrb[0].mxu0
        %v2088 = vadd.f32 0.0, %v2087
        %2089 = vdwg.mxu0
        %v2090 = vadd.f32 %v1968, %v2019
        %v2091 = vadd.f32 %v1969, %v2021
        %v2092 = vadd.f32 %v1970, %v2072
        %v2093 = vadd.f32 %v1971, %v2074
        %v2094 = vadd.f32 %v1972, %v2023
        %v2095 = vadd.f32 %v1973, %v2025
        %v2096 = vadd.f32 %v1974, %v2076
        %v2097 = vadd.f32 %v1975, %v2078
        %v2098 = vadd.f32 %v1976, %v2029
        %v2099 = vadd.f32 %v1977, %v2031
        %v2100 = vadd.f32 %v1978, %v2082
        %v2101 = vadd.f32 %v1979, %v2084
        %v2102 = vadd.f32 %v1980, %v2033
        %v2103 = vadd.f32 %v1981, %v2035
        %v2104 = vadd.f32 %v1982, %v2086
        %v2105 = vadd.f32 %v1983, %v2088
        %v2106 = vmul.f32 %v2090, 0.5
        %v2107 = vmul.f32 %v2094, 0.5
        %v2108 = vmul.f32 %v2098, 0.5
        %v2109 = vmul.f32 %v2102, 0.5
        %v2110 = vtanh.pop %v2106
        %v2111 = vtanh.pop %v2107
        %v2112 = vtanh.pop %v2108
        %v2113 = vtanh.pop %v2109
        %v2114 = vmul.f32 %v2110, 0.5
        %v2115 = vmul.f32 %v2111, 0.5
        %v2116 = vmul.f32 %v2112, 0.5
        %v2117 = vmul.f32 %v2113, 0.5
        %v2118 = vadd.f32 %v2114, 0.5
        %v2119 = vadd.f32 %v2115, 0.5
        %v2120 = vadd.f32 %v2116, 0.5
        %v2121 = vadd.f32 %v2117, 0.5
        %v2122 = vmul.f32 %v2091, 0.5
        %v2123 = vmul.f32 %v2095, 0.5
        %v2124 = vmul.f32 %v2099, 0.5
        %v2125 = vmul.f32 %v2103, 0.5
        %v2126 = vtanh.pop %v2122
        %v2127 = vtanh.pop %v2123
        %v2128 = vtanh.pop %v2124
        %v2129 = vtanh.pop %v2125
        %v2130 = vmul.f32 %v2126, 0.5
        %v2131 = vmul.f32 %v2127, 0.5
        %v2132 = vmul.f32 %v2128, 0.5
        %v2133 = vmul.f32 %v2129, 0.5
        %v2134 = vadd.f32 %v2130, 0.5
        %v2135 = vadd.f32 %v2131, 0.5
        %v2136 = vadd.f32 %v2132, 0.5
        %v2137 = vadd.f32 %v2133, 0.5
        %v2138 = vtanh.pop %v2092
        %v2139 = vtanh.pop %v2096
        %v2140 = vtanh.pop %v2100
        %v2141 = vtanh.pop %v2104
        %v2142 = vmul.f32 %v2093, 0.5
        %v2143 = vmul.f32 %v2097, 0.5
        %v2144 = vmul.f32 %v2101, 0.5
        %v2145 = vmul.f32 %v2105, 0.5
        %v2146 = vtanh.pop %v2142
        %v2147 = vtanh.pop %v2143
        %v2148 = vtanh.pop %v2144
        %v2149 = vtanh.pop %v2145
        %v2150 = vmul.f32 %v2146, 0.5
        %v2151 = vmul.f32 %v2147, 0.5
        %v2152 = vmul.f32 %v2148, 0.5
        %v2153 = vmul.f32 %v2149, 0.5
        %v2154 = vadd.f32 %v2150, 0.5
        %v2155 = vadd.f32 %v2151, 0.5
        %v2156 = vadd.f32 %v2152, 0.5
        %v2157 = vadd.f32 %v2153, 0.5
        %v2158 = vmul.f32 %v2134, %v1951
        %v2159 = vmul.f32 %v2135, %v1952
        %v2160 = vmul.f32 %v2136, %v1953
        %v2161 = vmul.f32 %v2137, %v1954
        %v2162 = vmul.f32 %v2118, %v2138
        %v2163 = vmul.f32 %v2119, %v2139
        %v2164 = vmul.f32 %v2120, %v2140
        %v2165 = vmul.f32 %v2121, %v2141
        %v2166 = vadd.f32 %v2158, %v2162
        %v2167 = vadd.f32 %v2159, %v2163
        %v2168 = vadd.f32 %v2160, %v2164
        %v2169 = vadd.f32 %v2161, %v2165
        %v2170 = vtanh.pop %v2166
        %v2171 = vtanh.pop %v2167
        %v2172 = vtanh.pop %v2168
        %v2173 = vtanh.pop %v2169
        %v2174 = vmul.f32 %v2154, %v2170
        %v2175 = vmul.f32 %v2155, %v2171
        %v2176 = vmul.f32 %v2156, %v2172
        %v2177 = vmul.f32 %v2157, %v2173
        %v2178 = vpack.c.bf16 %v2175, %v2174
        %v2179 = vpack.c.bf16 %v2177, %v2176
        %s2180 = scalar_lea.vmem [#allocation4], 16
        %2181 = vst [vmem:[%s2180] sm:$0xff] %v2178
        %2182 = vst [vmem:[%s2180 + $0x8] sm:$0xff] %v2179
        %v2183 = vld [vmem:[#allocation4] sm:$0xff]
        %v2184 = vld [vmem:[#allocation4 + $0x8] sm:$0xff]
        %v2185 = vld [vmem:[#allocation4 + $0x10] sm:$0xff]
        %v2186 = vld [vmem:[#allocation4 + $0x18] sm:$0xff]
        %v2187 = vld [vmem:[#allocation19] sm:$0xf]
        %v2188 = vld [vmem:[#allocation19 + $0x4] sm:$0xf]
        %v2189 = vld [vmem:[#allocation19 + $0x8] sm:$0xf]
        %v2190 = vld [vmem:[#allocation19 + $0xc] sm:$0xf]
        %v2191 = vld [vmem:[#allocation19 + $0x10] sm:$0xf]
        %v2192 = vld [vmem:[#allocation19 + $0x14] sm:$0xf]
        %v2193 = vld [vmem:[#allocation19 + $0x18] sm:$0xf]
        %v2194 = vld [vmem:[#allocation19 + $0x1c] sm:$0xf]
        %v2195 = vld [vmem:[#allocation19 + $0x20] sm:$0xf]
        %v2196 = vld [vmem:[#allocation19 + $0x24] sm:$0xf]
        %v2197 = vld [vmem:[#allocation19 + $0x28] sm:$0xf]
        %v2198 = vld [vmem:[#allocation19 + $0x2c] sm:$0xf]
        %v2199 = vld [vmem:[#allocation19 + $0x30] sm:$0xf]
        %v2200 = vld [vmem:[#allocation19 + $0x34] sm:$0xf]
        %v2201 = vld [vmem:[#allocation19 + $0x38] sm:$0xf]
        %v2202 = vld [vmem:[#allocation19 + $0x3c] sm:$0xf]
        %v2203 = vld [vmem:[#allocation20] sm:$0x1]
        %v2205 = vlaneseq
        %v2206 = vshrl.u32 %v2205, 7
        %v2207 = vsub.s32 0, %v2206
        %v2208 = vrot.slane %v2203, %v2207
        %v2226 = vunpack.c.l.b16 %v2187
        %v2227 = vunpack.c.l.b16 %v2188
        %v2228 = vunpack.c.l.b16 %v2189
        %v2229 = vunpack.c.l.b16 %v2190
        %v2230 = vunpack.c.l.b16 %v2191
        %v2231 = vunpack.c.l.b16 %v2192
        %v2232 = vunpack.c.l.b16 %v2193
        %v2233 = vunpack.c.l.b16 %v2194
        %v2234 = vunpack.c.l.b16 %v2195
        %v2235 = vunpack.c.l.b16 %v2196
        %v2236 = vunpack.c.l.b16 %v2197
        %v2237 = vunpack.c.l.b16 %v2198
        %v2238 = vunpack.c.l.b16 %v2199
        %v2239 = vunpack.c.l.b16 %v2200
        %v2240 = vunpack.c.l.b16 %v2201
        %v2241 = vunpack.c.l.b16 %v2202
        %v2242 = vpack.c.b16 %v2227, %v2226
        %v2243 = vpack.c.b16 %v2229, %v2228
        %v2244 = vpack.c.b16 %v2231, %v2230
        %v2245 = vpack.c.b16 %v2233, %v2232
        %v2246 = vpack.c.b16 %v2235, %v2234
        %v2247 = vpack.c.b16 %v2237, %v2236
        %v2248 = vpack.c.b16 %v2239, %v2238
        %v2249 = vpack.c.b16 %v2241, %v2240
        %2258 = vmatprep.subr.bf16.mxu0 0
        %2259 = vmatpush1.bf16.msra.mxu0 %v2242
        %2260 = vmatprep.subr.bf16.mxu0 0
        %2261 = vmatpush1.bf16.msra.mxu0 %v2243
        %2262 = vmatprep.subr.bf16.mxu0 0
        %2263 = vmatpush1.bf16.msra.mxu0 %v2244
        %2264 = vmatprep.subr.bf16.mxu0 0
        %2265 = vmatpush1.bf16.msra.mxu0 %v2245
        %2266 = vmatprep.subr.bf16.mxu0 0
        %2267 = vmatpush1.bf16.msra.mxu0 %v2246
        %2268 = vmatprep.subr.bf16.mxu0 0
        %2269 = vmatpush1.bf16.msra.mxu0 %v2247
        %2270 = vmatprep.subr.bf16.mxu0 0
        %2271 = vmatpush1.bf16.msra.mxu0 %v2248
        %2272 = vmatprep.subr.bf16.mxu0 0
        %2273 = vmatpush1.bf16.msra.mxu0 %v2249
        %2274 = vmatprep.subr.bf16.mxu0 0
        %2275 = vmatpush1.bf16.msra.mxu0 0
        %2276 = vmatprep.subr.bf16.mxu0 0
        %2277 = vmatpush1.bf16.msra.mxu0 0
        %2278 = vmatprep.subr.bf16.mxu0 0
        %2279 = vmatpush1.bf16.msra.mxu0 0
        %2280 = vmatprep.subr.bf16.mxu0 0
        %2281 = vmatpush1.bf16.msra.mxu0 0
        %2282 = vmatprep.subr.bf16.mxu0 0
        %2283 = vmatpush1.bf16.msra.mxu0 0
        %2284 = vmatprep.subr.bf16.mxu0 0
        %2285 = vmatpush1.bf16.msra.mxu0 0
        %2286 = vmatprep.subr.bf16.mxu0 0
        %2287 = vmatpush1.bf16.msra.mxu0 0
        %2288 = vmatprep.subr.bf16.mxu0 0
        %2289 = vmatpush1.bf16.msra.mxu0 0
        %2290 = vmatprep.mubr.bf16.mxu0 0
        %2291 = vmatmul.mubr.bf16.gmra.mrb[0].mxu0 %v2183
        %v2292 = vpop.f32.mrb[0].mxu0
        %v2293 = vadd.f32 %v2208, %v2292
        %v2294 = vpop.f32.mrb[0].mxu0
        %v2295 = vpop.f32.mrb[0].mxu0
        %v2296 = vadd.f32 %v2208, %v2295
        %v2297 = vpop.f32.mrb[0].mxu0
        %2298 = vmatprep.mubr.bf16.mxu0 0
        %2299 = vmatmul.mubr.bf16.gmra.mrb[0].mxu0 %v2184
        %v2300 = vpop.f32.mrb[0].mxu0
        %v2301 = vadd.f32 %v2208, %v2300
        %v2302 = vpop.f32.mrb[0].mxu0
        %v2303 = vpop.f32.mrb[0].mxu0
        %v2304 = vadd.f32 %v2208, %v2303
        %v2305 = vpop.f32.mrb[0].mxu0
        %2306 = vmatprep.mubr.bf16.mxu0 0
        %2307 = vmatmul.mubr.bf16.gmra.mrb[0].mxu0 %v2185
        %v2308 = vpop.f32.mrb[0].mxu0
        %v2309 = vadd.f32 %v2208, %v2308
        %v2310 = vpop.f32.mrb[0].mxu0
        %v2311 = vpop.f32.mrb[0].mxu0
        %v2312 = vadd.f32 %v2208, %v2311
        %v2313 = vpop.f32.mrb[0].mxu0
        %2314 = vmatprep.mubr.bf16.mxu0 0
        %2315 = vmatmul.mubr.bf16.gmra.mrb[0].mxu0 %v2186
        %v2316 = vpop.f32.mrb[0].mxu0
        %v2317 = vadd.f32 %v2208, %v2316
        %v2318 = vpop.f32.mrb[0].mxu0
        %v2319 = vpop.f32.mrb[0].mxu0
        %v2320 = vadd.f32 %v2208, %v2319
        %v2321 = vpop.f32.mrb[0].mxu0
        %2322 = vdwg.mxu0
        %vm2323 = vcmp.gt.f32.partialorder %v2293, 0.0
        %vm2324 = vcmp.gt.f32.partialorder %v2296, 0.0
        %vm2325 = vcmp.gt.f32.partialorder %v2301, 0.0
        %vm2326 = vcmp.gt.f32.partialorder %v2304, 0.0
        %vm2327 = vcmp.gt.f32.partialorder %v2309, 0.0
        %vm2328 = vcmp.gt.f32.partialorder %v2312, 0.0
        %vm2329 = vcmp.gt.f32.partialorder %v2317, 0.0
        %vm2330 = vcmp.gt.f32.partialorder %v2320, 0.0
        %v2331 = vmin.f32 %v2293, 0.0
        %v2332 = vmin.f32 %v2296, 0.0
        %v2333 = vmin.f32 %v2301, 0.0
        %v2334 = vmin.f32 %v2304, 0.0
        %v2335 = vmin.f32 %v2309, 0.0
        %v2336 = vmin.f32 %v2312, 0.0
        %v2337 = vmin.f32 %v2317, 0.0
        %v2338 = vmin.f32 %v2320, 0.0
        %v2339 = vmul.f32 %v2331, 1.442695
        %v2340 = vpow.pop %v2339
        %v2341 = vmul.f32 %v2332, 1.442695
        %v2342 = vpow.pop %v2341
        %v2343 = vmul.f32 %v2333, 1.442695
        %v2344 = vpow.pop %v2343
        %v2345 = vmul.f32 %v2334, 1.442695
        %v2346 = vpow.pop %v2345
        %v2347 = vmul.f32 %v2335, 1.442695
        %v2348 = vpow.pop %v2347
        %v2349 = vmul.f32 %v2336, 1.442695
        %v2350 = vpow.pop %v2349
        %v2351 = vmul.f32 %v2337, 1.442695
        %v2352 = vpow.pop %v2351
        %v2353 = vmul.f32 %v2338, 1.442695
        %v2354 = vpow.pop %v2353
        %v2355 = vsub.f32 %v2340, 1.0
        %v2356 = vsub.f32 %v2342, 1.0
        %v2357 = vsub.f32 %v2344, 1.0
        %v2358 = vsub.f32 %v2346, 1.0
        %v2359 = vsub.f32 %v2348, 1.0
        %v2360 = vsub.f32 %v2350, 1.0
        %v2361 = vsub.f32 %v2352, 1.0
        %v2362 = vsub.f32 %v2354, 1.0
        %v2363 = vsel %vm2323, %v2293, %v2355
        %v2364 = vsel %vm2324, %v2296, %v2356
        %v2365 = vsel %vm2325, %v2301, %v2357
        %v2366 = vsel %vm2326, %v2304, %v2358
        %v2367 = vsel %vm2327, %v2309, %v2359
        %v2368 = vsel %vm2328, %v2312, %v2360
        %v2369 = vsel %vm2329, %v2317, %v2361
        %v2370 = vsel %vm2330, %v2320, %v2362
        %p2371 = scmp.eq.s32.totalorder %s34, 1
        // Predicated region
        $region101: #{tpu_custom_call.1} parent=59 // pred_check
          %p2372 = pneg %p2371
        $region102: #{tpu_custom_call.1} parent=59 // pred_check_branch
          %2374 = sbr.rel (%p2372) target = $region104
        $region103: #{tpu_custom_call.1} parent=59 // pred_region
          %v2375 = vlaneseq
          %v2376 = vshrl.u32 %v2375, 7
          %v2377 = vadd.s32 %v2376, 8
          %v2378 = vadd.s32 %v2376, 16
          %v2379 = vadd.s32 %v2376, 24
          %vm2380 = vcmp.lt.s32.totalorder %v2376, 2
          %vm2381 = vcmp.lt.s32.totalorder %v2377, 2
          %vm2382 = vcmp.lt.s32.totalorder %v2378, 2
          %vm2383 = vcmp.lt.s32.totalorder %v2379, 2
          %v2384 = vsel %vm2380, %v2363, 0.0
          %v2385 = vsel %vm2381, %v2364, 0.0
          %v2386 = vsel %vm2382, %v2365, 0.0
          %v2387 = vsel %vm2383, %v2366, 0.0
          %v2388 = vsel %vm2380, %v2367, 0.0
          %v2389 = vsel %vm2381, %v2368, 0.0
          %v2390 = vsel %vm2382, %v2369, 0.0
          %v2391 = vsel %vm2383, %v2370, 0.0
          %v2392 = vadd.f32 %v2384, %v2385
          %v2393 = vadd.f32 %v2392, %v2386
          %v2394 = vadd.f32 %v2393, %v2387
          %v2395 = vrot.slane %v2394, 4
          %v2396 = vadd.f32 %v2394, %v2395
          %v2397 = vrot.slane %v2396, 2
          %v2398 = vadd.f32 %v2396, %v2397
          %v2399 = vrot.slane %v2398, 1
          %v2400 = vadd.f32 %v2398, %v2399
          %v2401 = vadd.f32 %v2388, %v2389
          %v2402 = vadd.f32 %v2401, %v2390
          %v2403 = vadd.f32 %v2402, %v2391
          %v2404 = vrot.slane %v2403, 4
          %v2405 = vadd.f32 %v2403, %v2404
          %v2406 = vrot.slane %v2405, 2
          %v2407 = vadd.f32 %v2405, %v2406
          %v2408 = vrot.slane %v2407, 1
          %v2409 = vadd.f32 %v2407, %v2408
          %vm2412 = vcmask 1041409
          %v2413 = vsel %vm2412, %v2409, %v2400
          %2415 = vst [vmem:[%s588] sm:$0x3] %v2413
        $region104: #{tpu_custom_call.1} parent=59 // pred_fallthru
          _
        %p2416 = scmp.ne.s32.totalorder %s34, 1
        // Predicated region
        $region105: #{tpu_custom_call.1} parent=59 // pred_check
          %p2417 = pneg %p2416
        $region106: #{tpu_custom_call.1} parent=59 // pred_check_branch
          %2419 = sbr.rel (%p2417) target = $region108
        $region107: #{tpu_custom_call.1} parent=59 // pred_region
          %v2420 = vadd.f32 %v2363, %v2364
          %v2421 = vadd.f32 %v2420, %v2365
          %v2422 = vadd.f32 %v2421, %v2366
          %v2423 = vrot.slane %v2422, 4
          %v2424 = vadd.f32 %v2422, %v2423
          %v2425 = vrot.slane %v2424, 2
          %v2426 = vadd.f32 %v2424, %v2425
          %v2427 = vrot.slane %v2426, 1
          %v2428 = vadd.f32 %v2426, %v2427
          %v2429 = vadd.f32 %v2367, %v2368
          %v2430 = vadd.f32 %v2429, %v2369
          %v2431 = vadd.f32 %v2430, %v2370
          %v2432 = vrot.slane %v2431, 4
          %v2433 = vadd.f32 %v2431, %v2432
          %v2434 = vrot.slane %v2433, 2
          %v2435 = vadd.f32 %v2433, %v2434
          %v2436 = vrot.slane %v2435, 1
          %v2437 = vadd.f32 %v2435, %v2436
          %vm2440 = vcmask 1041409
          %v2441 = vsel %vm2440, %v2437, %v2428
          %2443 = vst [vmem:[%s588] sm:$0x3] %v2441
        $region108: #{tpu_custom_call.1} parent=59 // pred_fallthru
          _
        %s2444 = sand.u32 %s266, 1
        %s2445 = scalar_lea.sflag [#allocation7], %s2444
        %s2446 = sand.u32 %s266, 1
        %s2447 = smul.addr %s2446, 2
        %s2448 = scalar_lea.vmem [#allocation22], %s2447
        // Predicated region
        $region109: #{tpu_custom_call.1} parent=59 // pred_check
          %p2449 = pneg %p276
        $region110: #{tpu_custom_call.1} parent=59 // pred_check_branch
          %2451 = sbr.rel (%p2449) target = $region112
        $region111: #{tpu_custom_call.1} parent=59 // pred_region
          %s2453 = ssub.s32 32, 32
          %2454 = vsyncadd %s2445, %s2453
          %s2455 = smul.addr %s34, 32
          %s2456 = scalar_lea.hbm %s10, %s2455
          %s2458 = sshll.u32 %s2448, 4
          %s2459 = int_to_ptr.vmem [resolvable:$true] %s2458
          %2461 = dma.vmem_to_hbm [thread:$0]  %s2459, 32, %s2456, %s2445
        $region112: #{tpu_custom_call.1} parent=59 // pred_fallthru
          _
      $region60: #{tpu_custom_call.1} parent=5 // pred_fallthru
        _
      %p2462 = scmp.le.s32.totalorder 2, %s29
      // Predicated region
      $region113: #{tpu_custom_call.1} parent=5 // pred_check
        %p2463 = pneg %p2462
      $region114: #{tpu_custom_call.1} parent=5 // pred_check_branch
        %2465 = sbr.rel (%p2463) target = $region116
      $region115: #{tpu_custom_call.1} parent=5 // pred_region
        %s2466 = ssub.s32 %s29, 2
        // Predicated region
        $region117: #{tpu_custom_call.1} parent=115 // pred_check
          %p2467 = pneg %p282
        $region118: #{tpu_custom_call.1} parent=115 // pred_check_branch
          %2469 = sbr.rel (%p2467) target = $region120
        $region119: #{tpu_custom_call.1} parent=115 // pred_region
          %s2470 = sand.u32 %s267, 1
          %s2471 = scalar_lea.sflag [#allocation7], %s2470
          %s2472 = sand.u32 %s267, 1
          %s2473 = smul.addr %s2472, 2
          %s2474 = scalar_lea.vmem [#allocation22], %s2473
          %2475 = dma.done %s2471, 32
        $region120: #{tpu_custom_call.1} parent=115 // pred_fallthru
          _
      $region116: #{tpu_custom_call.1} parent=5 // pred_fallthru
        _
    $region6: #{tpu_custom_call.1} parent=1 // loop_footer
      %s33 = sadd.s32 1, %s29
    $region7: #{tpu_custom_call.1} parent=1 // loop_footer_branch
      %28 = sbr.rel target = $region3
    $region8: #{tpu_custom_call.1} parent=1 // loop_exit
      _
    %2476 = vsyncpa [#allocation6], 1
    %s2477 = scalar_lea.sflag [#allocation6], 1
    %2478 = vsyncpa %s2477, 1
    %2479 = vsyncpa [#allocation9], 1
    %s2480 = scalar_lea.sflag [#allocation9], 1
    %2481 = vsyncpa %s2480, 1
    %2482 = vsyncpa [#allocation12], 1
    %2483 = vsyncpa [#allocation15], 1
    %2484 = vsyncpa [#allocation18], 1
    %2485 = vsyncpa [#allocation21], 1
    %2486 = vsyncpa [#allocation7], 1
    %s2487 = scalar_lea.sflag [#allocation7], 1
    %2488 = vsyncpa %s2487, 1

</llo_original>
